<compile_context>
chip_gen: v7x
topology: tpu7x:2x2x1
jax: 0.10.0
libtpu: 0.0.40
codegen_flags: <defaults>
</compile_context>

<pallas_src>
import functools

import jax
import jax.numpy as jnp
from jax.experimental import pallas as pl
from jax.experimental.pallas import tpu as pltpu

# OGB atom feature cardinalities (get_atom_feature_dims()).
ATOM_FEATURE_DIMS = [119, 5, 12, 12, 10, 6, 6, 2, 2]

# Static Python offsets of each feature's rows inside the concatenated table.
_OFFSETS = []
_acc = 0
for _dim in ATOM_FEATURE_DIMS:
    _OFFSETS.append(_acc)
    _acc += _dim
_OFFSETS = tuple(_OFFSETS)
_TOTAL_VOCAB = _acc


def _atom_encoder_kernel(x_ref, table_ref, out_ref, *, offsets):
    # x_ref:     (TN, F)     int32  raw (un-offset) feature indices
    # table_ref: (V_pad, D)  bf16   concatenated + zero-padded embeddings
    # out_ref:   (TN, D)     f32
    x = x_ref[...]
    tn = x.shape[0]
    v_pad = table_ref.shape[0]

    # Multi-hot build: hit[n, v] = any_i (x[n, i] + offsets[i] == v).
    # Offsets are static Python ints (folded into the compare); the offset
    # ranges are disjoint so OR-accumulation is exact for valid inputs.
    col = jax.lax.broadcasted_iota(jnp.int32, (tn, v_pad), 1)
    hit = None
    for i, off in enumerate(offsets):
        cmp = col == (x[:, i:i + 1] + off)
        hit = cmp if hit is None else jnp.logical_or(hit, cmp)
    mh = hit.astype(jnp.bfloat16)  # single cast; values are exactly 0/1

    # Sum of embedding lookups == multi-hot @ concat table (bf16 MXU path,
    # f32 accumulation).
    out_ref[...] = jnp.dot(mh, table_ref[...],
                           preferred_element_type=jnp.float32)


def atom_encoder(x, table, *, tile_n=256):
    """x: [N, F] integer raw feature indices; table: [V_pad, D] concat table.

    Returns [N, D] float32 = sum of per-feature embedding lookups.
    """
    n, f = x.shape
    v_pad, d = table.shape
    assert f == len(ATOM_FEATURE_DIMS)

    # bf16 operands for the native MXU path (accumulation stays f32).
    if table.dtype != jnp.bfloat16:
        table = table.astype(jnp.bfloat16)

    # Pad N up to a multiple of the row tile (pad rows sliced off afterwards).
    n_blocks = pl.cdiv(n, tile_n)
    n_pad = n_blocks * tile_n
    x = x.astype(jnp.int32)
    if n_pad != n:
        x = jnp.pad(x, ((0, n_pad - n), (0, 0)))

    kernel = functools.partial(_atom_encoder_kernel, offsets=_OFFSETS)
    out = pl.pallas_call(
        kernel,
        out_shape=jax.ShapeDtypeStruct((n_pad, d), jnp.float32),
        grid_spec=pltpu.PrefetchScalarGridSpec(
            num_scalar_prefetch=0,
            grid=(n_blocks,),
            in_specs=[
                pl.BlockSpec((tile_n, f), lambda i: (i, 0)),
                pl.BlockSpec((v_pad, d), lambda i: (0, 0)),
            ],
            out_specs=pl.BlockSpec((tile_n, d), lambda i: (i, 0)),
        ),
        compiler_params=pltpu.CompilerParams(
            dimension_semantics=("parallel",)),
    )(x, table)
    return out[:n]


def make_params(emb_dim, key):
    """Xavier-uniform init of each embedding table, concatenated + padded."""
    tables = []
    for i, dim in enumerate(ATOM_FEATURE_DIMS):
        k = jax.random.fold_in(key, i)
        bound = (6.0 / (dim + emb_dim)) ** 0.5
        tables.append(
            jax.random.uniform(k, (dim, emb_dim), jnp.float32,
                               minval=-bound, maxval=bound))
    table = jnp.concatenate(tables, axis=0)        # [sum(dims), D]
    v_pad = ((_TOTAL_VOCAB + 127) // 128) * 128    # pad vocab to lane multiple
    table = jnp.pad(table, ((0, v_pad - _TOTAL_VOCAB), (0, 0)))
    return table, tables


def reference(x, tables):
    out = 0
    for i, t in enumerate(tables):
        out = out + t[x[:, i]]
    return out


if __name__ == "__main__":
    key = jax.random.PRNGKey(0)
    emb_dim = 128
    n_atoms = 300          # not a multiple of the tile -> exercises padding
    f = len(ATOM_FEATURE_DIMS)

    table, tables = make_params(emb_dim, key)

    # Deterministic integer feature matrix, each column within its cardinality.
    cols = []
    for i, dim in enumerate(ATOM_FEATURE_DIMS):
        k = jax.random.fold_in(jax.random.PRNGKey(1), i)
        cols.append(jax.random.randint(k, (n_atoms, 1), 0, dim,
                                       dtype=jnp.int32))
    x = jnp.concatenate(cols, axis=1)  # [N, F]

    out = atom_encoder(x, table, tile_n=128)  # grid of 3 row tiles
    out = jax.block_until_ready(out)

    ref = reference(x, tables)  # f32 reference (original module semantics)
    assert out.shape == (n_atoms, emb_dim)
    # bf16 table quantization -> relaxed tolerance (sum of 9 bf16-rounded
    # values, each |v| <~ 0.22, worst-case abs error ~4e-3).
    assert jnp.allclose(out, ref, atol=1e-2, rtol=1e-2)
    print("KERNEL_OK")
</pallas_src>

<mosaic_0001>
module attributes {stable_mosaic.version = 11 : i64} {
  func.func @_atom_encoder_kernel(%arg0: i32, %arg1: memref<128x9xi32, #tpu.memory_space<vmem>>, %arg2: memref<256x128xbf16, #tpu.memory_space<vmem>>, %arg3: memref<128x128xf32, #tpu.memory_space<vmem>>) attributes {dimension_semantics = [#tpu.dimension_semantics<parallel>], iteration_bounds = array<i64: 3>, scalar_prefetch = 0 : i64, scratch_operands = 0 : i64, tpu.core_type = #tpu.core_type<tc>, window_params = [{transform_indices = @transform_0, window_bounds = array<i64: 128, 9>}, {pipeline_mode = #tpu.pipeline_mode<synchronous>, transform_indices = @transform_1, window_bounds = array<i64: 256, 128>}, {transform_indices = @transform_2, window_bounds = array<i64: 128, 128>}]} {
    %c0 = arith.constant 0 : index
    %c0_0 = arith.constant 0 : index
    %0 = vector.load %arg1[%c0, %c0_0] : memref<128x9xi32, #tpu.memory_space<vmem>>, vector<128x9xi32>
    %1 = tpu.iota {dimensions = array<i32: 1>} : vector<128x256xi32>
    %2 = vector.extract_strided_slice %0 {offsets = [0, 0], sizes = [128, 1], strides = [1, 1]} : vector<128x9xi32> to vector<128x1xi32>
    %c0_i32 = arith.constant 0 : i32
    %3 = vector.broadcast %c0_i32 : i32 to vector<128x1xi32>
    %4 = arith.addi %2, %3 : vector<128x1xi32>
    %5 = vector.broadcast %4 : vector<128x1xi32> to vector<128x256xi32>
    %6 = arith.cmpi eq, %1, %5 : vector<128x256xi32>
    %7 = vector.extract_strided_slice %0 {offsets = [0, 1], sizes = [128, 1], strides = [1, 1]} : vector<128x9xi32> to vector<128x1xi32>
    %c119_i32 = arith.constant 119 : i32
    %8 = vector.broadcast %c119_i32 : i32 to vector<128x1xi32>
    %9 = arith.addi %7, %8 : vector<128x1xi32>
    %10 = vector.broadcast %9 : vector<128x1xi32> to vector<128x256xi32>
    %11 = arith.cmpi eq, %1, %10 : vector<128x256xi32>
    %12 = arith.ori %6, %11 : vector<128x256xi1>
    %13 = vector.extract_strided_slice %0 {offsets = [0, 2], sizes = [128, 1], strides = [1, 1]} : vector<128x9xi32> to vector<128x1xi32>
    %c124_i32 = arith.constant 124 : i32
    %14 = vector.broadcast %c124_i32 : i32 to vector<128x1xi32>
    %15 = arith.addi %13, %14 : vector<128x1xi32>
    %16 = vector.broadcast %15 : vector<128x1xi32> to vector<128x256xi32>
    %17 = arith.cmpi eq, %1, %16 : vector<128x256xi32>
    %18 = arith.ori %12, %17 : vector<128x256xi1>
    %19 = vector.extract_strided_slice %0 {offsets = [0, 3], sizes = [128, 1], strides = [1, 1]} : vector<128x9xi32> to vector<128x1xi32>
    %c136_i32 = arith.constant 136 : i32
    %20 = vector.broadcast %c136_i32 : i32 to vector<128x1xi32>
    %21 = arith.addi %19, %20 : vector<128x1xi32>
    %22 = vector.broadcast %21 : vector<128x1xi32> to vector<128x256xi32>
    %23 = arith.cmpi eq, %1, %22 : vector<128x256xi32>
    %24 = arith.ori %18, %23 : vector<128x256xi1>
    %25 = vector.extract_strided_slice %0 {offsets = [0, 4], sizes = [128, 1], strides = [1, 1]} : vector<128x9xi32> to vector<128x1xi32>
    %c148_i32 = arith.constant 148 : i32
    %26 = vector.broadcast %c148_i32 : i32 to vector<128x1xi32>
    %27 = arith.addi %25, %26 : vector<128x1xi32>
    %28 = vector.broadcast %27 : vector<128x1xi32> to vector<128x256xi32>
    %29 = arith.cmpi eq, %1, %28 : vector<128x256xi32>
    %30 = arith.ori %24, %29 : vector<128x256xi1>
    %31 = vector.extract_strided_slice %0 {offsets = [0, 5], sizes = [128, 1], strides = [1, 1]} : vector<128x9xi32> to vector<128x1xi32>
    %c158_i32 = arith.constant 158 : i32
    %32 = vector.broadcast %c158_i32 : i32 to vector<128x1xi32>
    %33 = arith.addi %31, %32 : vector<128x1xi32>
    %34 = vector.broadcast %33 : vector<128x1xi32> to vector<128x256xi32>
    %35 = arith.cmpi eq, %1, %34 : vector<128x256xi32>
    %36 = arith.ori %30, %35 : vector<128x256xi1>
    %37 = vector.extract_strided_slice %0 {offsets = [0, 6], sizes = [128, 1], strides = [1, 1]} : vector<128x9xi32> to vector<128x1xi32>
    %c164_i32 = arith.constant 164 : i32
    %38 = vector.broadcast %c164_i32 : i32 to vector<128x1xi32>
    %39 = arith.addi %37, %38 : vector<128x1xi32>
    %40 = vector.broadcast %39 : vector<128x1xi32> to vector<128x256xi32>
    %41 = arith.cmpi eq, %1, %40 : vector<128x256xi32>
    %42 = arith.ori %36, %41 : vector<128x256xi1>
    %43 = vector.extract_strided_slice %0 {offsets = [0, 7], sizes = [128, 1], strides = [1, 1]} : vector<128x9xi32> to vector<128x1xi32>
    %c170_i32 = arith.constant 170 : i32
    %44 = vector.broadcast %c170_i32 : i32 to vector<128x1xi32>
    %45 = arith.addi %43, %44 : vector<128x1xi32>
    %46 = vector.broadcast %45 : vector<128x1xi32> to vector<128x256xi32>
    %47 = arith.cmpi eq, %1, %46 : vector<128x256xi32>
    %48 = arith.ori %42, %47 : vector<128x256xi1>
    %49 = vector.extract_strided_slice %0 {offsets = [0, 8], sizes = [128, 1], strides = [1, 1]} : vector<128x9xi32> to vector<128x1xi32>
    %c172_i32 = arith.constant 172 : i32
    %50 = vector.broadcast %c172_i32 : i32 to vector<128x1xi32>
    %51 = arith.addi %49, %50 : vector<128x1xi32>
    %52 = vector.broadcast %51 : vector<128x1xi32> to vector<128x256xi32>
    %53 = arith.cmpi eq, %1, %52 : vector<128x256xi32>
    %54 = arith.ori %48, %53 : vector<128x256xi1>
    %55 = arith.extui %54 : vector<128x256xi1> to vector<128x256xi32>
    %56 = arith.sitofp %55 : vector<128x256xi32> to vector<128x256xf32>
    %57 = arith.truncf %56 : vector<128x256xf32> to vector<128x256xbf16>
    %c0_1 = arith.constant 0 : index
    %c0_2 = arith.constant 0 : index
    %58 = vector.load %arg2[%c0_1, %c0_2] : memref<256x128xbf16, #tpu.memory_space<vmem>>, vector<256x128xbf16>
    %cst = arith.constant dense<0.000000e+00> : vector<128x128xf32>
    %59 = tpu.matmul %57, %58, %cst {dimension_numbers = #tpu.dot_dimension_numbers<[1], [0], [0], [1], [0, 0, 1, 1], [], []>} : vector<128x256xbf16>, vector<256x128xbf16>, vector<128x128xf32> -> vector<128x128xf32>
    %c0_3 = arith.constant 0 : index
    %c0_4 = arith.constant 0 : index
    %60 = vector.load %arg3[%c0_3, %c0_4] : memref<128x128xf32, #tpu.memory_space<vmem>>, vector<128x128xf32>
    tpu.vector_store %arg3[%c0_3, %c0_4], %59 {strides = array<i32>} : memref<128x128xf32, #tpu.memory_space<vmem>>, vector<128x128xf32>,
    return
  }
  func.func @transform_0(%arg0: i32) -> (i32, i32) {
    %c0_i32 = arith.constant 0 : i32
    %c0_i32_0 = arith.constant 0 : i32
    return %arg0, %c0_i32 : i32, i32
  }
  func.func @transform_1(%arg0: i32) -> (i32, i32) {
    %c0_i32 = arith.constant 0 : i32
    %c0_i32_0 = arith.constant 0 : i32
    %c0_i32_1 = arith.constant 0 : i32
    return %c0_i32, %c0_i32_0 : i32, i32
  }
  func.func @transform_2(%arg0: i32) -> (i32, i32) {
    %c0_i32 = arith.constant 0 : i32
    %c0_i32_0 = arith.constant 0 : i32
    return %arg0, %c0_i32 : i32, i32
  }
}

</mosaic_0001>

<llo_original>
// kernel: tpu_custom_call.1
$region0: #{tpu_custom_call.1}
  #allocation0 [shape = 'u32[]', space=smem, size = 0x4, offset = 0x4, fixed_abs, tag = 'smem constant byte address 0x4 - core index']
  #allocation1 [shape = 'u32[144,128]{1,0:T(1,128)}', space=vmem, size = 0x12000, scoped, tag = 'internal scratch']
  %s0 = inlined_call_operand.vmem [shape: s32[384,9], index: 0, kind: input, shape index: {}]
  %s1 = inlined_call_operand.vmem [shape: bf16[256,128], index: 1, kind: input, shape index: {}]
  %s2 = inlined_call_operand.hbm [shape: f32[384,128], index: 2, kind: output, shape index: {}]
  %s3 = sld [smem:[#allocation0]]
  $region41: #{tpu_custom_call.1} parent=0
    _
  %s5 = ssub.s32 1, %s3
  %s6 = scalar_select 0, %s5, %s3
  $region1: #{tpu_custom_call.1} parent=0
    #allocation2 [shape = 'u8[131072]{0}', space=vmem, size = 0x20000, scoped, tag = 'output window, operand 0']
    #allocation3 [shape = 's32[2]{0}', space=sflag, size = 0x8, scoped, tag = 'scoped memory for tpu_custom_call.1']
    %7 = vsyncpa [#allocation3], 0
    %s8 = scalar_lea.sflag [#allocation3], 1
    %9 = vsyncpa %s8, 0
    loop: start=0, step=1, limit=5
    $region2: #{tpu_custom_call.1} parent=1 // loop_pre_header
      _
    $region3: #{tpu_custom_call.1} parent=1 // loop_header
      %s11 = sphi 0, %s15
      %p12 = scmp.ge.s32.totalorder %s11, 5
      %s21 = sphi 0, %s23
      %s24 = sphi 0, %s21
      %s25 = sphi 0, %s24
      %s41 = sphi 0, %s25
      %s45 = sphi 0, %s45
      %s47 = sphi 0, %s45
      %s48 = sphi 0, %s47
      %s62 = sphi 0, %s48
      %s68 = sphi 0, %s70
      %s71 = sphi 0, %s68
      %s72 = sphi 0, %s71
      %s88 = sphi 0, %s72
    $region4: #{tpu_custom_call.1} parent=1 // loop_header_branch
      %14 = sbr.rel (%p12) target = $region8
    $region5: #{tpu_custom_call.1} parent=1 // loop_body
      %s16 = ssub.s32 %s11, 1
      %s17 = ssub.s32 %s11, 2
      %s18 = sadd.s32 %s11, 1
      %s19 = ssub.s32 %s11, %s18
      %p20 = scmp.eq.s32.totalorder %s19, 0
      %s22 = sadd.s32 %s21, 1
      %s23 = scalar_select %p20, %s21, %s22
      %p26 = pneg %p20
      %p27 = scmp.eq.s32.totalorder %s11, 2
      %p28 = por %p26, %p27
      %p29 = scmp.ne.s32.totalorder %s21, %s24
      %p30 = scmp.eq.s32.totalorder %s11, 0
      %p31 = por %p29, %p30
      %p32 = scmp.ne.s32.totalorder %s21, %s24
      %p33 = scmp.eq.s32.totalorder %s16, 2
      %p34 = por %p32, %p33
      %p35 = scmp.ne.s32.totalorder %s24, %s25
      %p36 = scmp.eq.s32.totalorder %s16, 0
      %p37 = por %p35, %p36
      %p38 = scmp.ne.s32.totalorder %s24, %s25
      %p39 = scmp.eq.s32.totalorder %s17, 2
      %p40 = por %p38, %p39
      %p42 = scmp.ne.s32.totalorder %s25, %s41
      %p43 = scmp.eq.s32.totalorder %s17, 0
      %p44 = por %p42, %p43
      %s46 = sadd.s32 %s45, 1
      %p49 = scmp.eq.s32.totalorder %s11, 2
      %p50 = scmp.ne.s32.totalorder %s45, %s47
      %p51 = scmp.eq.s32.totalorder %s11, 0
      %p52 = por %p50, %p51
      %p53 = scmp.ne.s32.totalorder %s45, %s47
      %p54 = scmp.eq.s32.totalorder %s16, 2
      %p55 = por %p53, %p54
      %p56 = scmp.ne.s32.totalorder %s47, %s48
      %p57 = scmp.eq.s32.totalorder %s16, 0
      %p58 = por %p56, %p57
      %p59 = scmp.ne.s32.totalorder %s47, %s48
      %p60 = scmp.eq.s32.totalorder %s17, 2
      %p61 = por %p59, %p60
      %p63 = scmp.ne.s32.totalorder %s48, %s62
      %p64 = scmp.eq.s32.totalorder %s17, 0
      %p65 = por %p63, %p64
      %s66 = ssub.s32 %s11, %s18
      %p67 = scmp.eq.s32.totalorder %s66, 0
      %s69 = sadd.s32 %s68, 1
      %s70 = scalar_select %p67, %s68, %s69
      %p73 = pneg %p67
      %p74 = scmp.eq.s32.totalorder %s11, 2
      %p75 = por %p73, %p74
      %p76 = scmp.ne.s32.totalorder %s68, %s71
      %p77 = scmp.eq.s32.totalorder %s11, 0
      %p78 = por %p76, %p77
      %p79 = scmp.ne.s32.totalorder %s68, %s71
      %p80 = scmp.eq.s32.totalorder %s16, 2
      %p81 = por %p79, %p80
      %p82 = scmp.ne.s32.totalorder %s71, %s72
      %p83 = scmp.eq.s32.totalorder %s16, 0
      %p84 = por %p82, %p83
      %p85 = scmp.ne.s32.totalorder %s71, %s72
      %p86 = scmp.eq.s32.totalorder %s17, 2
      %p87 = por %p85, %p86
      %p89 = scmp.ne.s32.totalorder %s72, %s88
      %p90 = scmp.eq.s32.totalorder %s17, 0
      %p91 = por %p89, %p90
      %p92 = scmp.le.s32.totalorder 1, %s11
      %p93 = scmp.lt.s32.totalorder %s11, 4
      %p94 = pnand %p92, %p93
      %p95 = pneg %p94
      // Predicated region
      $region9: #{tpu_custom_call.1} parent=5 // pred_check
        _
      $region10: #{tpu_custom_call.1} parent=5 // pred_check_branch
        %97 = sbr.rel (%p94) target = $region12
      $region11: #{tpu_custom_call.1} parent=5 // pred_region
        %s98 = ssub.s32 %s11, 1
        // Predicated region
        $region13: #{tpu_custom_call.1} parent=11 // pred_check
          %p99 = pneg %p58
        $region14: #{tpu_custom_call.1} parent=11 // pred_check_branch
          %101 = sbr.rel (%p99) target = $region16
        $region15: #{tpu_custom_call.1} parent=11 // pred_region
          _
        $region16: #{tpu_custom_call.1} parent=11 // pred_fallthru
          _
      $region12: #{tpu_custom_call.1} parent=5 // pred_fallthru
        _
      %p102 = scmp.lt.s32.totalorder %s11, 3
      // Predicated region
      $region17: #{tpu_custom_call.1} parent=5 // pred_check
        %p103 = pneg %p102
      $region18: #{tpu_custom_call.1} parent=5 // pred_check_branch
        %105 = sbr.rel (%p103) target = $region20
      $region19: #{tpu_custom_call.1} parent=5 // pred_region
        // Predicated region
        $region21: #{tpu_custom_call.1} parent=19 // pred_check
          %p106 = pneg %p31
        $region22: #{tpu_custom_call.1} parent=19 // pred_check_branch
          %108 = sbr.rel (%p106) target = $region24
        $region23: #{tpu_custom_call.1} parent=19 // pred_region
          %s109 = smul.u32 16, %s11
          %p110 = scmp.lt.s32.totalorder %s109, 47
          %s111 = scalar_select %p110, %s109, 47
          %s112 = smul.addr %s111, 8
          %s113 = scalar_lea.vmem %s0, %s112
          %s114 = smul.u32 16, %s11
        $region24: #{tpu_custom_call.1} parent=19 // pred_fallthru
          _
      $region20: #{tpu_custom_call.1} parent=5 // pred_fallthru
        _
      %p115 = scmp.le.s32.totalorder 1, %s11
      %p116 = scmp.lt.s32.totalorder %s11, 4
      %p117 = pnand %p115, %p116
      %p118 = pneg %p117
      // Predicated region
      $region25: #{tpu_custom_call.1} parent=5 // pred_check
        _
      $region26: #{tpu_custom_call.1} parent=5 // pred_check_branch
        %120 = sbr.rel (%p117) target = $region28
      $region27: #{tpu_custom_call.1} parent=5 // pred_region
        %s121 = ssub.s32 %s11, 1
        %s122 = smul.u32 16, %s16
        %p123 = scmp.lt.s32.totalorder %s122, 47
        %s124 = scalar_select %p123, %s122, 47
        %s125 = smul.addr %s124, 8
        %s126 = scalar_lea.vmem %s0, %s125
        %p127 = pneg %p37
        %p128 = pneg %p34
        %p129 = pneg %p58
        %p130 = pneg %p55
        %p131 = pneg %p84
        %p132 = pneg %p81
        %s133 = sand.u32 %s71, 1
        %s134 = scalar_lea.sflag [#allocation3], %s133
        %s135 = sand.u32 %s71, 1
        %s136 = smul.addr %s135, 128
        %s137 = scalar_lea.vmem [#allocation2], %s136
        %s138 = smul.u32 16, %s16
        %p139 = scmp.lt.s32.totalorder %s138, 47
        %s140 = scalar_select %p139, %s138, 47
        %s141 = smul.addr %s140, 8
        %s142 = scalar_lea.vmem %s0, %s141
        %s143 = smul.u32 16, %s16
        %s144 = smul.u32 16, %s16
        %v146 = vld [vmem:[%s142] sm:$0xff]
        %v147 = vld [vmem:[%s142 + $0x8] sm:$0xff]
        %v148 = vld [vmem:[%s142 + $0x10] sm:$0xff]
        %v149 = vld [vmem:[%s142 + $0x18] sm:$0xff]
        %v150 = vld [vmem:[%s142 + $0x20] sm:$0xff]
        %v151 = vld [vmem:[%s142 + $0x28] sm:$0xff]
        %v152 = vld [vmem:[%s142 + $0x30] sm:$0xff]
        %v153 = vld [vmem:[%s142 + $0x38] sm:$0xff]
        %v154 = vld [vmem:[%s142 + $0x40] sm:$0xff]
        %v155 = vld [vmem:[%s142 + $0x48] sm:$0xff]
        %v156 = vld [vmem:[%s142 + $0x50] sm:$0xff]
        %v157 = vld [vmem:[%s142 + $0x58] sm:$0xff]
        %v158 = vld [vmem:[%s142 + $0x60] sm:$0xff]
        %v159 = vld [vmem:[%s142 + $0x68] sm:$0xff]
        %v160 = vld [vmem:[%s142 + $0x70] sm:$0xff]
        %v161 = vld [vmem:[%s142 + $0x78] sm:$0xff]
        %v162 = vlaneseq
        %v163 = vand.u32 %v162, 127
        %v164 = vadd.s32 %v163, 128
        %165 = vset.pattern.permute.xlu0 0
        %166 = vperm.xlu0 %165, %v146
        %v167 = vpop.permute.xlu0 %166
        %168 = vset.pattern.permute.xlu0 0
        %169 = vperm.xlu0 %168, %v147
        %v170 = vpop.permute.xlu0 %169
        %171 = vset.pattern.permute.xlu0 0
        %172 = vperm.xlu0 %171, %v148
        %v173 = vpop.permute.xlu0 %172
        %174 = vset.pattern.permute.xlu0 0
        %175 = vperm.xlu0 %174, %v149
        %v176 = vpop.permute.xlu0 %175
        %177 = vset.pattern.permute.xlu0 0
        %178 = vperm.xlu0 %177, %v150
        %v179 = vpop.permute.xlu0 %178
        %180 = vset.pattern.permute.xlu0 0
        %181 = vperm.xlu0 %180, %v151
        %v182 = vpop.permute.xlu0 %181
        %183 = vset.pattern.permute.xlu0 0
        %184 = vperm.xlu0 %183, %v152
        %v185 = vpop.permute.xlu0 %184
        %186 = vset.pattern.permute.xlu0 0
        %187 = vperm.xlu0 %186, %v153
        %v188 = vpop.permute.xlu0 %187
        %189 = vset.pattern.permute.xlu0 0
        %190 = vperm.xlu0 %189, %v154
        %v191 = vpop.permute.xlu0 %190
        %192 = vset.pattern.permute.xlu0 0
        %193 = vperm.xlu0 %192, %v155
        %v194 = vpop.permute.xlu0 %193
        %195 = vset.pattern.permute.xlu0 0
        %196 = vperm.xlu0 %195, %v156
        %v197 = vpop.permute.xlu0 %196
        %198 = vset.pattern.permute.xlu0 0
        %199 = vperm.xlu0 %198, %v157
        %v200 = vpop.permute.xlu0 %199
        %201 = vset.pattern.permute.xlu0 0
        %202 = vperm.xlu0 %201, %v158
        %v203 = vpop.permute.xlu0 %202
        %204 = vset.pattern.permute.xlu0 0
        %205 = vperm.xlu0 %204, %v159
        %v206 = vpop.permute.xlu0 %205
        %207 = vset.pattern.permute.xlu0 0
        %208 = vperm.xlu0 %207, %v160
        %v209 = vpop.permute.xlu0 %208
        %210 = vset.pattern.permute.xlu0 0
        %211 = vperm.xlu0 %210, %v161
        %v212 = vpop.permute.xlu0 %211
        %vm213 = vcmp.eq.s32.totalorder %v163, %v167
        %vm214 = vcmp.eq.s32.totalorder %v164, %v167
        %vm215 = vcmp.eq.s32.totalorder %v163, %v170
        %vm216 = vcmp.eq.s32.totalorder %v164, %v170
        %vm217 = vcmp.eq.s32.totalorder %v163, %v173
        %vm218 = vcmp.eq.s32.totalorder %v164, %v173
        %vm219 = vcmp.eq.s32.totalorder %v163, %v176
        %vm220 = vcmp.eq.s32.totalorder %v164, %v176
        %vm221 = vcmp.eq.s32.totalorder %v163, %v179
        %vm222 = vcmp.eq.s32.totalorder %v164, %v179
        %vm223 = vcmp.eq.s32.totalorder %v163, %v182
        %vm224 = vcmp.eq.s32.totalorder %v164, %v182
        %vm225 = vcmp.eq.s32.totalorder %v163, %v185
        %vm226 = vcmp.eq.s32.totalorder %v164, %v185
        %vm227 = vcmp.eq.s32.totalorder %v163, %v188
        %vm228 = vcmp.eq.s32.totalorder %v164, %v188
        %vm229 = vcmp.eq.s32.totalorder %v163, %v191
        %vm230 = vcmp.eq.s32.totalorder %v164, %v191
        %vm231 = vcmp.eq.s32.totalorder %v163, %v194
        %vm232 = vcmp.eq.s32.totalorder %v164, %v194
        %vm233 = vcmp.eq.s32.totalorder %v163, %v197
        %vm234 = vcmp.eq.s32.totalorder %v164, %v197
        %vm235 = vcmp.eq.s32.totalorder %v163, %v200
        %vm236 = vcmp.eq.s32.totalorder %v164, %v200
        %vm237 = vcmp.eq.s32.totalorder %v163, %v203
        %vm238 = vcmp.eq.s32.totalorder %v164, %v203
        %vm239 = vcmp.eq.s32.totalorder %v163, %v206
        %vm240 = vcmp.eq.s32.totalorder %v164, %v206
        %vm241 = vcmp.eq.s32.totalorder %v163, %v209
        %vm242 = vcmp.eq.s32.totalorder %v164, %v209
        %vm243 = vcmp.eq.s32.totalorder %v163, %v212
        %vm244 = vcmp.eq.s32.totalorder %v164, %v212
        %v245 = vadd.s32 %v146, 119
        %v246 = vadd.s32 %v147, 119
        %v247 = vadd.s32 %v148, 119
        %v248 = vadd.s32 %v149, 119
        %v249 = vadd.s32 %v150, 119
        %v250 = vadd.s32 %v151, 119
        %v251 = vadd.s32 %v152, 119
        %v252 = vadd.s32 %v153, 119
        %v253 = vadd.s32 %v154, 119
        %v254 = vadd.s32 %v155, 119
        %v255 = vadd.s32 %v156, 119
        %v256 = vadd.s32 %v157, 119
        %v257 = vadd.s32 %v158, 119
        %v258 = vadd.s32 %v159, 119
        %v259 = vadd.s32 %v160, 119
        %v260 = vadd.s32 %v161, 119
        %261 = vset.pattern.permute.xlu0 1
        %262 = vperm.xlu0 %261, %v245
        %v263 = vpop.permute.xlu0 %262
        %264 = vset.pattern.permute.xlu0 1
        %265 = vperm.xlu0 %264, %v246
        %v266 = vpop.permute.xlu0 %265
        %267 = vset.pattern.permute.xlu0 1
        %268 = vperm.xlu0 %267, %v247
        %v269 = vpop.permute.xlu0 %268
        %270 = vset.pattern.permute.xlu0 1
        %271 = vperm.xlu0 %270, %v248
        %v272 = vpop.permute.xlu0 %271
        %273 = vset.pattern.permute.xlu0 1
        %274 = vperm.xlu0 %273, %v249
        %v275 = vpop.permute.xlu0 %274
        %276 = vset.pattern.permute.xlu0 1
        %277 = vperm.xlu0 %276, %v250
        %v278 = vpop.permute.xlu0 %277
        %279 = vset.pattern.permute.xlu0 1
        %280 = vperm.xlu0 %279, %v251
        %v281 = vpop.permute.xlu0 %280
        %282 = vset.pattern.permute.xlu0 1
        %283 = vperm.xlu0 %282, %v252
        %v284 = vpop.permute.xlu0 %283
        %285 = vset.pattern.permute.xlu0 1
        %286 = vperm.xlu0 %285, %v253
        %v287 = vpop.permute.xlu0 %286
        %288 = vset.pattern.permute.xlu0 1
        %289 = vperm.xlu0 %288, %v254
        %v290 = vpop.permute.xlu0 %289
        %291 = vset.pattern.permute.xlu0 1
        %292 = vperm.xlu0 %291, %v255
        %v293 = vpop.permute.xlu0 %292
        %294 = vset.pattern.permute.xlu0 1
        %295 = vperm.xlu0 %294, %v256
        %v296 = vpop.permute.xlu0 %295
        %297 = vset.pattern.permute.xlu0 1
        %298 = vperm.xlu0 %297, %v257
        %v299 = vpop.permute.xlu0 %298
        %300 = vset.pattern.permute.xlu0 1
        %301 = vperm.xlu0 %300, %v258
        %v302 = vpop.permute.xlu0 %301
        %303 = vset.pattern.permute.xlu0 1
        %304 = vperm.xlu0 %303, %v259
        %v305 = vpop.permute.xlu0 %304
        %306 = vset.pattern.permute.xlu0 1
        %307 = vperm.xlu0 %306, %v260
        %v308 = vpop.permute.xlu0 %307
        %vm309 = vcmp.eq.s32.totalorder %v163, %v263
        %vm310 = vcmp.eq.s32.totalorder %v164, %v263
        %vm311 = vcmp.eq.s32.totalorder %v163, %v266
        %vm312 = vcmp.eq.s32.totalorder %v164, %v266
        %vm313 = vcmp.eq.s32.totalorder %v163, %v269
        %vm314 = vcmp.eq.s32.totalorder %v164, %v269
        %vm315 = vcmp.eq.s32.totalorder %v163, %v272
        %vm316 = vcmp.eq.s32.totalorder %v164, %v272
        %vm317 = vcmp.eq.s32.totalorder %v163, %v275
        %vm318 = vcmp.eq.s32.totalorder %v164, %v275
        %vm319 = vcmp.eq.s32.totalorder %v163, %v278
        %vm320 = vcmp.eq.s32.totalorder %v164, %v278
        %vm321 = vcmp.eq.s32.totalorder %v163, %v281
        %vm322 = vcmp.eq.s32.totalorder %v164, %v281
        %vm323 = vcmp.eq.s32.totalorder %v163, %v284
        %vm324 = vcmp.eq.s32.totalorder %v164, %v284
        %vm325 = vcmp.eq.s32.totalorder %v163, %v287
        %vm326 = vcmp.eq.s32.totalorder %v164, %v287
        %vm327 = vcmp.eq.s32.totalorder %v163, %v290
        %vm328 = vcmp.eq.s32.totalorder %v164, %v290
        %vm329 = vcmp.eq.s32.totalorder %v163, %v293
        %vm330 = vcmp.eq.s32.totalorder %v164, %v293
        %vm331 = vcmp.eq.s32.totalorder %v163, %v296
        %vm332 = vcmp.eq.s32.totalorder %v164, %v296
        %vm333 = vcmp.eq.s32.totalorder %v163, %v299
        %vm334 = vcmp.eq.s32.totalorder %v164, %v299
        %vm335 = vcmp.eq.s32.totalorder %v163, %v302
        %vm336 = vcmp.eq.s32.totalorder %v164, %v302
        %vm337 = vcmp.eq.s32.totalorder %v163, %v305
        %vm338 = vcmp.eq.s32.totalorder %v164, %v305
        %vm339 = vcmp.eq.s32.totalorder %v163, %v308
        %vm340 = vcmp.eq.s32.totalorder %v164, %v308
        %vm341 = vmor %vm213, %vm309
        %vm342 = vmor %vm214, %vm310
        %vm343 = vmor %vm215, %vm311
        %vm344 = vmor %vm216, %vm312
        %vm345 = vmor %vm217, %vm313
        %vm346 = vmor %vm218, %vm314
        %vm347 = vmor %vm219, %vm315
        %vm348 = vmor %vm220, %vm316
        %vm349 = vmor %vm221, %vm317
        %vm350 = vmor %vm222, %vm318
        %vm351 = vmor %vm223, %vm319
        %vm352 = vmor %vm224, %vm320
        %vm353 = vmor %vm225, %vm321
        %vm354 = vmor %vm226, %vm322
        %vm355 = vmor %vm227, %vm323
        %vm356 = vmor %vm228, %vm324
        %vm357 = vmor %vm229, %vm325
        %vm358 = vmor %vm230, %vm326
        %vm359 = vmor %vm231, %vm327
        %vm360 = vmor %vm232, %vm328
        %vm361 = vmor %vm233, %vm329
        %vm362 = vmor %vm234, %vm330
        %vm363 = vmor %vm235, %vm331
        %vm364 = vmor %vm236, %vm332
        %vm365 = vmor %vm237, %vm333
        %vm366 = vmor %vm238, %vm334
        %vm367 = vmor %vm239, %vm335
        %vm368 = vmor %vm240, %vm336
        %vm369 = vmor %vm241, %vm337
        %vm370 = vmor %vm242, %vm338
        %vm371 = vmor %vm243, %vm339
        %vm372 = vmor %vm244, %vm340
        %v373 = vadd.s32 %v146, 124
        %v374 = vadd.s32 %v147, 124
        %v375 = vadd.s32 %v148, 124
        %v376 = vadd.s32 %v149, 124
        %v377 = vadd.s32 %v150, 124
        %v378 = vadd.s32 %v151, 124
        %v379 = vadd.s32 %v152, 124
        %v380 = vadd.s32 %v153, 124
        %v381 = vadd.s32 %v154, 124
        %v382 = vadd.s32 %v155, 124
        %v383 = vadd.s32 %v156, 124
        %v384 = vadd.s32 %v157, 124
        %v385 = vadd.s32 %v158, 124
        %v386 = vadd.s32 %v159, 124
        %v387 = vadd.s32 %v160, 124
        %v388 = vadd.s32 %v161, 124
        %389 = vset.pattern.permute.xlu0 2
        %390 = vperm.xlu0 %389, %v373
        %v391 = vpop.permute.xlu0 %390
        %392 = vset.pattern.permute.xlu0 2
        %393 = vperm.xlu0 %392, %v374
        %v394 = vpop.permute.xlu0 %393
        %395 = vset.pattern.permute.xlu0 2
        %396 = vperm.xlu0 %395, %v375
        %v397 = vpop.permute.xlu0 %396
        %398 = vset.pattern.permute.xlu0 2
        %399 = vperm.xlu0 %398, %v376
        %v400 = vpop.permute.xlu0 %399
        %401 = vset.pattern.permute.xlu0 2
        %402 = vperm.xlu0 %401, %v377
        %v403 = vpop.permute.xlu0 %402
        %404 = vset.pattern.permute.xlu0 2
        %405 = vperm.xlu0 %404, %v378
        %v406 = vpop.permute.xlu0 %405
        %407 = vset.pattern.permute.xlu0 2
        %408 = vperm.xlu0 %407, %v379
        %v409 = vpop.permute.xlu0 %408
        %410 = vset.pattern.permute.xlu0 2
        %411 = vperm.xlu0 %410, %v380
        %v412 = vpop.permute.xlu0 %411
        %413 = vset.pattern.permute.xlu0 2
        %414 = vperm.xlu0 %413, %v381
        %v415 = vpop.permute.xlu0 %414
        %416 = vset.pattern.permute.xlu0 2
        %417 = vperm.xlu0 %416, %v382
        %v418 = vpop.permute.xlu0 %417
        %419 = vset.pattern.permute.xlu0 2
        %420 = vperm.xlu0 %419, %v383
        %v421 = vpop.permute.xlu0 %420
        %422 = vset.pattern.permute.xlu0 2
        %423 = vperm.xlu0 %422, %v384
        %v424 = vpop.permute.xlu0 %423
        %425 = vset.pattern.permute.xlu0 2
        %426 = vperm.xlu0 %425, %v385
        %v427 = vpop.permute.xlu0 %426
        %428 = vset.pattern.permute.xlu0 2
        %429 = vperm.xlu0 %428, %v386
        %v430 = vpop.permute.xlu0 %429
        %431 = vset.pattern.permute.xlu0 2
        %432 = vperm.xlu0 %431, %v387
        %v433 = vpop.permute.xlu0 %432
        %434 = vset.pattern.permute.xlu0 2
        %435 = vperm.xlu0 %434, %v388
        %v436 = vpop.permute.xlu0 %435
        %vm437 = vcmp.eq.s32.totalorder %v163, %v391
        %vm438 = vcmp.eq.s32.totalorder %v164, %v391
        %vm439 = vcmp.eq.s32.totalorder %v163, %v394
        %vm440 = vcmp.eq.s32.totalorder %v164, %v394
        %vm441 = vcmp.eq.s32.totalorder %v163, %v397
        %vm442 = vcmp.eq.s32.totalorder %v164, %v397
        %vm443 = vcmp.eq.s32.totalorder %v163, %v400
        %vm444 = vcmp.eq.s32.totalorder %v164, %v400
        %vm445 = vcmp.eq.s32.totalorder %v163, %v403
        %vm446 = vcmp.eq.s32.totalorder %v164, %v403
        %vm447 = vcmp.eq.s32.totalorder %v163, %v406
        %vm448 = vcmp.eq.s32.totalorder %v164, %v406
        %vm449 = vcmp.eq.s32.totalorder %v163, %v409
        %vm450 = vcmp.eq.s32.totalorder %v164, %v409
        %vm451 = vcmp.eq.s32.totalorder %v163, %v412
        %vm452 = vcmp.eq.s32.totalorder %v164, %v412
        %vm453 = vcmp.eq.s32.totalorder %v163, %v415
        %vm454 = vcmp.eq.s32.totalorder %v164, %v415
        %vm455 = vcmp.eq.s32.totalorder %v163, %v418
        %vm456 = vcmp.eq.s32.totalorder %v164, %v418
        %vm457 = vcmp.eq.s32.totalorder %v163, %v421
        %vm458 = vcmp.eq.s32.totalorder %v164, %v421
        %vm459 = vcmp.eq.s32.totalorder %v163, %v424
        %vm460 = vcmp.eq.s32.totalorder %v164, %v424
        %vm461 = vcmp.eq.s32.totalorder %v163, %v427
        %vm462 = vcmp.eq.s32.totalorder %v164, %v427
        %vm463 = vcmp.eq.s32.totalorder %v163, %v430
        %vm464 = vcmp.eq.s32.totalorder %v164, %v430
        %vm465 = vcmp.eq.s32.totalorder %v163, %v433
        %vm466 = vcmp.eq.s32.totalorder %v164, %v433
        %vm467 = vcmp.eq.s32.totalorder %v163, %v436
        %vm468 = vcmp.eq.s32.totalorder %v164, %v436
        %vm469 = vmor %vm341, %vm437
        %vm470 = vmor %vm342, %vm438
        %vm471 = vmor %vm343, %vm439
        %vm472 = vmor %vm344, %vm440
        %vm473 = vmor %vm345, %vm441
        %vm474 = vmor %vm346, %vm442
        %vm475 = vmor %vm347, %vm443
        %vm476 = vmor %vm348, %vm444
        %vm477 = vmor %vm349, %vm445
        %vm478 = vmor %vm350, %vm446
        %vm479 = vmor %vm351, %vm447
        %vm480 = vmor %vm352, %vm448
        %vm481 = vmor %vm353, %vm449
        %vm482 = vmor %vm354, %vm450
        %vm483 = vmor %vm355, %vm451
        %vm484 = vmor %vm356, %vm452
        %vm485 = vmor %vm357, %vm453
        %vm486 = vmor %vm358, %vm454
        %vm487 = vmor %vm359, %vm455
        %vm488 = vmor %vm360, %vm456
        %vm489 = vmor %vm361, %vm457
        %vm490 = vmor %vm362, %vm458
        %vm491 = vmor %vm363, %vm459
        %vm492 = vmor %vm364, %vm460
        %vm493 = vmor %vm365, %vm461
        %vm494 = vmor %vm366, %vm462
        %vm495 = vmor %vm367, %vm463
        %vm496 = vmor %vm368, %vm464
        %vm497 = vmor %vm369, %vm465
        %vm498 = vmor %vm370, %vm466
        %vm499 = vmor %vm371, %vm467
        %vm500 = vmor %vm372, %vm468
        %v501 = vadd.s32 %v146, 136
        %v502 = vadd.s32 %v147, 136
        %v503 = vadd.s32 %v148, 136
        %v504 = vadd.s32 %v149, 136
        %v505 = vadd.s32 %v150, 136
        %v506 = vadd.s32 %v151, 136
        %v507 = vadd.s32 %v152, 136
        %v508 = vadd.s32 %v153, 136
        %v509 = vadd.s32 %v154, 136
        %v510 = vadd.s32 %v155, 136
        %v511 = vadd.s32 %v156, 136
        %v512 = vadd.s32 %v157, 136
        %v513 = vadd.s32 %v158, 136
        %v514 = vadd.s32 %v159, 136
        %v515 = vadd.s32 %v160, 136
        %v516 = vadd.s32 %v161, 136
        %517 = vset.pattern.permute.xlu0 3
        %518 = vperm.xlu0 %517, %v501
        %v519 = vpop.permute.xlu0 %518
        %520 = vset.pattern.permute.xlu0 3
        %521 = vperm.xlu0 %520, %v502
        %v522 = vpop.permute.xlu0 %521
        %523 = vset.pattern.permute.xlu0 3
        %524 = vperm.xlu0 %523, %v503
        %v525 = vpop.permute.xlu0 %524
        %526 = vset.pattern.permute.xlu0 3
        %527 = vperm.xlu0 %526, %v504
        %v528 = vpop.permute.xlu0 %527
        %529 = vset.pattern.permute.xlu0 3
        %530 = vperm.xlu0 %529, %v505
        %v531 = vpop.permute.xlu0 %530
        %532 = vset.pattern.permute.xlu0 3
        %533 = vperm.xlu0 %532, %v506
        %v534 = vpop.permute.xlu0 %533
        %535 = vset.pattern.permute.xlu0 3
        %536 = vperm.xlu0 %535, %v507
        %v537 = vpop.permute.xlu0 %536
        %538 = vset.pattern.permute.xlu0 3
        %539 = vperm.xlu0 %538, %v508
        %v540 = vpop.permute.xlu0 %539
        %541 = vset.pattern.permute.xlu0 3
        %542 = vperm.xlu0 %541, %v509
        %v543 = vpop.permute.xlu0 %542
        %544 = vset.pattern.permute.xlu0 3
        %545 = vperm.xlu0 %544, %v510
        %v546 = vpop.permute.xlu0 %545
        %547 = vset.pattern.permute.xlu0 3
        %548 = vperm.xlu0 %547, %v511
        %v549 = vpop.permute.xlu0 %548
        %550 = vset.pattern.permute.xlu0 3
        %551 = vperm.xlu0 %550, %v512
        %v552 = vpop.permute.xlu0 %551
        %553 = vset.pattern.permute.xlu0 3
        %554 = vperm.xlu0 %553, %v513
        %v555 = vpop.permute.xlu0 %554
        %556 = vset.pattern.permute.xlu0 3
        %557 = vperm.xlu0 %556, %v514
        %v558 = vpop.permute.xlu0 %557
        %559 = vset.pattern.permute.xlu0 3
        %560 = vperm.xlu0 %559, %v515
        %v561 = vpop.permute.xlu0 %560
        %562 = vset.pattern.permute.xlu0 3
        %563 = vperm.xlu0 %562, %v516
        %v564 = vpop.permute.xlu0 %563
        %vm565 = vcmp.eq.s32.totalorder %v163, %v519
        %vm566 = vcmp.eq.s32.totalorder %v164, %v519
        %vm567 = vcmp.eq.s32.totalorder %v163, %v522
        %vm568 = vcmp.eq.s32.totalorder %v164, %v522
        %vm569 = vcmp.eq.s32.totalorder %v163, %v525
        %vm570 = vcmp.eq.s32.totalorder %v164, %v525
        %vm571 = vcmp.eq.s32.totalorder %v163, %v528
        %vm572 = vcmp.eq.s32.totalorder %v164, %v528
        %vm573 = vcmp.eq.s32.totalorder %v163, %v531
        %vm574 = vcmp.eq.s32.totalorder %v164, %v531
        %vm575 = vcmp.eq.s32.totalorder %v163, %v534
        %vm576 = vcmp.eq.s32.totalorder %v164, %v534
        %vm577 = vcmp.eq.s32.totalorder %v163, %v537
        %vm578 = vcmp.eq.s32.totalorder %v164, %v537
        %vm579 = vcmp.eq.s32.totalorder %v163, %v540
        %vm580 = vcmp.eq.s32.totalorder %v164, %v540
        %vm581 = vcmp.eq.s32.totalorder %v163, %v543
        %vm582 = vcmp.eq.s32.totalorder %v164, %v543
        %vm583 = vcmp.eq.s32.totalorder %v163, %v546
        %vm584 = vcmp.eq.s32.totalorder %v164, %v546
        %vm585 = vcmp.eq.s32.totalorder %v163, %v549
        %vm586 = vcmp.eq.s32.totalorder %v164, %v549
        %vm587 = vcmp.eq.s32.totalorder %v163, %v552
        %vm588 = vcmp.eq.s32.totalorder %v164, %v552
        %vm589 = vcmp.eq.s32.totalorder %v163, %v555
        %vm590 = vcmp.eq.s32.totalorder %v164, %v555
        %vm591 = vcmp.eq.s32.totalorder %v163, %v558
        %vm592 = vcmp.eq.s32.totalorder %v164, %v558
        %vm593 = vcmp.eq.s32.totalorder %v163, %v561
        %vm594 = vcmp.eq.s32.totalorder %v164, %v561
        %vm595 = vcmp.eq.s32.totalorder %v163, %v564
        %vm596 = vcmp.eq.s32.totalorder %v164, %v564
        %vm597 = vmor %vm469, %vm565
        %vm598 = vmor %vm470, %vm566
        %vm599 = vmor %vm471, %vm567
        %vm600 = vmor %vm472, %vm568
        %vm601 = vmor %vm473, %vm569
        %vm602 = vmor %vm474, %vm570
        %vm603 = vmor %vm475, %vm571
        %vm604 = vmor %vm476, %vm572
        %vm605 = vmor %vm477, %vm573
        %vm606 = vmor %vm478, %vm574
        %vm607 = vmor %vm479, %vm575
        %vm608 = vmor %vm480, %vm576
        %vm609 = vmor %vm481, %vm577
        %vm610 = vmor %vm482, %vm578
        %vm611 = vmor %vm483, %vm579
        %vm612 = vmor %vm484, %vm580
        %vm613 = vmor %vm485, %vm581
        %vm614 = vmor %vm486, %vm582
        %vm615 = vmor %vm487, %vm583
        %vm616 = vmor %vm488, %vm584
        %vm617 = vmor %vm489, %vm585
        %vm618 = vmor %vm490, %vm586
        %vm619 = vmor %vm491, %vm587
        %vm620 = vmor %vm492, %vm588
        %vm621 = vmor %vm493, %vm589
        %vm622 = vmor %vm494, %vm590
        %vm623 = vmor %vm495, %vm591
        %vm624 = vmor %vm496, %vm592
        %vm625 = vmor %vm497, %vm593
        %vm626 = vmor %vm498, %vm594
        %vm627 = vmor %vm499, %vm595
        %vm628 = vmor %vm500, %vm596
        %v629 = vadd.s32 %v146, 148
        %v630 = vadd.s32 %v147, 148
        %v631 = vadd.s32 %v148, 148
        %v632 = vadd.s32 %v149, 148
        %v633 = vadd.s32 %v150, 148
        %v634 = vadd.s32 %v151, 148
        %v635 = vadd.s32 %v152, 148
        %v636 = vadd.s32 %v153, 148
        %v637 = vadd.s32 %v154, 148
        %v638 = vadd.s32 %v155, 148
        %v639 = vadd.s32 %v156, 148
        %v640 = vadd.s32 %v157, 148
        %v641 = vadd.s32 %v158, 148
        %v642 = vadd.s32 %v159, 148
        %v643 = vadd.s32 %v160, 148
        %v644 = vadd.s32 %v161, 148
        %645 = vset.pattern.permute.xlu0 4
        %646 = vperm.xlu0 %645, %v629
        %v647 = vpop.permute.xlu0 %646
        %648 = vset.pattern.permute.xlu0 4
        %649 = vperm.xlu0 %648, %v630
        %v650 = vpop.permute.xlu0 %649
        %651 = vset.pattern.permute.xlu0 4
        %652 = vperm.xlu0 %651, %v631
        %v653 = vpop.permute.xlu0 %652
        %654 = vset.pattern.permute.xlu0 4
        %655 = vperm.xlu0 %654, %v632
        %v656 = vpop.permute.xlu0 %655
        %657 = vset.pattern.permute.xlu0 4
        %658 = vperm.xlu0 %657, %v633
        %v659 = vpop.permute.xlu0 %658
        %660 = vset.pattern.permute.xlu0 4
        %661 = vperm.xlu0 %660, %v634
        %v662 = vpop.permute.xlu0 %661
        %663 = vset.pattern.permute.xlu0 4
        %664 = vperm.xlu0 %663, %v635
        %v665 = vpop.permute.xlu0 %664
        %666 = vset.pattern.permute.xlu0 4
        %667 = vperm.xlu0 %666, %v636
        %v668 = vpop.permute.xlu0 %667
        %669 = vset.pattern.permute.xlu0 4
        %670 = vperm.xlu0 %669, %v637
        %v671 = vpop.permute.xlu0 %670
        %672 = vset.pattern.permute.xlu0 4
        %673 = vperm.xlu0 %672, %v638
        %v674 = vpop.permute.xlu0 %673
        %675 = vset.pattern.permute.xlu0 4
        %676 = vperm.xlu0 %675, %v639
        %v677 = vpop.permute.xlu0 %676
        %678 = vset.pattern.permute.xlu0 4
        %679 = vperm.xlu0 %678, %v640
        %v680 = vpop.permute.xlu0 %679
        %681 = vset.pattern.permute.xlu0 4
        %682 = vperm.xlu0 %681, %v641
        %v683 = vpop.permute.xlu0 %682
        %684 = vset.pattern.permute.xlu0 4
        %685 = vperm.xlu0 %684, %v642
        %v686 = vpop.permute.xlu0 %685
        %687 = vset.pattern.permute.xlu0 4
        %688 = vperm.xlu0 %687, %v643
        %v689 = vpop.permute.xlu0 %688
        %690 = vset.pattern.permute.xlu0 4
        %691 = vperm.xlu0 %690, %v644
        %v692 = vpop.permute.xlu0 %691
        %vm693 = vcmp.eq.s32.totalorder %v163, %v647
        %vm694 = vcmp.eq.s32.totalorder %v164, %v647
        %vm695 = vcmp.eq.s32.totalorder %v163, %v650
        %vm696 = vcmp.eq.s32.totalorder %v164, %v650
        %vm697 = vcmp.eq.s32.totalorder %v163, %v653
        %vm698 = vcmp.eq.s32.totalorder %v164, %v653
        %vm699 = vcmp.eq.s32.totalorder %v163, %v656
        %vm700 = vcmp.eq.s32.totalorder %v164, %v656
        %vm701 = vcmp.eq.s32.totalorder %v163, %v659
        %vm702 = vcmp.eq.s32.totalorder %v164, %v659
        %vm703 = vcmp.eq.s32.totalorder %v163, %v662
        %vm704 = vcmp.eq.s32.totalorder %v164, %v662
        %vm705 = vcmp.eq.s32.totalorder %v163, %v665
        %vm706 = vcmp.eq.s32.totalorder %v164, %v665
        %vm707 = vcmp.eq.s32.totalorder %v163, %v668
        %vm708 = vcmp.eq.s32.totalorder %v164, %v668
        %vm709 = vcmp.eq.s32.totalorder %v163, %v671
        %vm710 = vcmp.eq.s32.totalorder %v164, %v671
        %vm711 = vcmp.eq.s32.totalorder %v163, %v674
        %vm712 = vcmp.eq.s32.totalorder %v164, %v674
        %vm713 = vcmp.eq.s32.totalorder %v163, %v677
        %vm714 = vcmp.eq.s32.totalorder %v164, %v677
        %vm715 = vcmp.eq.s32.totalorder %v163, %v680
        %vm716 = vcmp.eq.s32.totalorder %v164, %v680
        %vm717 = vcmp.eq.s32.totalorder %v163, %v683
        %vm718 = vcmp.eq.s32.totalorder %v164, %v683
        %vm719 = vcmp.eq.s32.totalorder %v163, %v686
        %vm720 = vcmp.eq.s32.totalorder %v164, %v686
        %vm721 = vcmp.eq.s32.totalorder %v163, %v689
        %vm722 = vcmp.eq.s32.totalorder %v164, %v689
        %vm723 = vcmp.eq.s32.totalorder %v163, %v692
        %vm724 = vcmp.eq.s32.totalorder %v164, %v692
        %vm725 = vmor %vm597, %vm693
        %vm726 = vmor %vm598, %vm694
        %vm727 = vmor %vm599, %vm695
        %vm728 = vmor %vm600, %vm696
        %vm729 = vmor %vm601, %vm697
        %vm730 = vmor %vm602, %vm698
        %vm731 = vmor %vm603, %vm699
        %vm732 = vmor %vm604, %vm700
        %vm733 = vmor %vm605, %vm701
        %vm734 = vmor %vm606, %vm702
        %vm735 = vmor %vm607, %vm703
        %vm736 = vmor %vm608, %vm704
        %vm737 = vmor %vm609, %vm705
        %vm738 = vmor %vm610, %vm706
        %vm739 = vmor %vm611, %vm707
        %vm740 = vmor %vm612, %vm708
        %vm741 = vmor %vm613, %vm709
        %vm742 = vmor %vm614, %vm710
        %vm743 = vmor %vm615, %vm711
        %vm744 = vmor %vm616, %vm712
        %vm745 = vmor %vm617, %vm713
        %vm746 = vmor %vm618, %vm714
        %vm747 = vmor %vm619, %vm715
        %vm748 = vmor %vm620, %vm716
        %vm749 = vmor %vm621, %vm717
        %vm750 = vmor %vm622, %vm718
        %vm751 = vmor %vm623, %vm719
        %vm752 = vmor %vm624, %vm720
        %vm753 = vmor %vm625, %vm721
        %vm754 = vmor %vm626, %vm722
        %vm755 = vmor %vm627, %vm723
        %vm756 = vmor %vm628, %vm724
        %v757 = vadd.s32 %v146, 158
        %v758 = vadd.s32 %v147, 158
        %v759 = vadd.s32 %v148, 158
        %v760 = vadd.s32 %v149, 158
        %v761 = vadd.s32 %v150, 158
        %v762 = vadd.s32 %v151, 158
        %v763 = vadd.s32 %v152, 158
        %v764 = vadd.s32 %v153, 158
        %v765 = vadd.s32 %v154, 158
        %v766 = vadd.s32 %v155, 158
        %v767 = vadd.s32 %v156, 158
        %v768 = vadd.s32 %v157, 158
        %v769 = vadd.s32 %v158, 158
        %v770 = vadd.s32 %v159, 158
        %v771 = vadd.s32 %v160, 158
        %v772 = vadd.s32 %v161, 158
        %773 = vset.pattern.permute.xlu0 5
        %774 = vperm.xlu0 %773, %v757
        %v775 = vpop.permute.xlu0 %774
        %776 = vset.pattern.permute.xlu0 5
        %777 = vperm.xlu0 %776, %v758
        %v778 = vpop.permute.xlu0 %777
        %779 = vset.pattern.permute.xlu0 5
        %780 = vperm.xlu0 %779, %v759
        %v781 = vpop.permute.xlu0 %780
        %782 = vset.pattern.permute.xlu0 5
        %783 = vperm.xlu0 %782, %v760
        %v784 = vpop.permute.xlu0 %783
        %785 = vset.pattern.permute.xlu0 5
        %786 = vperm.xlu0 %785, %v761
        %v787 = vpop.permute.xlu0 %786
        %788 = vset.pattern.permute.xlu0 5
        %789 = vperm.xlu0 %788, %v762
        %v790 = vpop.permute.xlu0 %789
        %791 = vset.pattern.permute.xlu0 5
        %792 = vperm.xlu0 %791, %v763
        %v793 = vpop.permute.xlu0 %792
        %794 = vset.pattern.permute.xlu0 5
        %795 = vperm.xlu0 %794, %v764
        %v796 = vpop.permute.xlu0 %795
        %797 = vset.pattern.permute.xlu0 5
        %798 = vperm.xlu0 %797, %v765
        %v799 = vpop.permute.xlu0 %798
        %800 = vset.pattern.permute.xlu0 5
        %801 = vperm.xlu0 %800, %v766
        %v802 = vpop.permute.xlu0 %801
        %803 = vset.pattern.permute.xlu0 5
        %804 = vperm.xlu0 %803, %v767
        %v805 = vpop.permute.xlu0 %804
        %806 = vset.pattern.permute.xlu0 5
        %807 = vperm.xlu0 %806, %v768
        %v808 = vpop.permute.xlu0 %807
        %809 = vset.pattern.permute.xlu0 5
        %810 = vperm.xlu0 %809, %v769
        %v811 = vpop.permute.xlu0 %810
        %812 = vset.pattern.permute.xlu0 5
        %813 = vperm.xlu0 %812, %v770
        %v814 = vpop.permute.xlu0 %813
        %815 = vset.pattern.permute.xlu0 5
        %816 = vperm.xlu0 %815, %v771
        %v817 = vpop.permute.xlu0 %816
        %818 = vset.pattern.permute.xlu0 5
        %819 = vperm.xlu0 %818, %v772
        %v820 = vpop.permute.xlu0 %819
        %vm821 = vcmp.eq.s32.totalorder %v163, %v775
        %vm822 = vcmp.eq.s32.totalorder %v164, %v775
        %vm823 = vcmp.eq.s32.totalorder %v163, %v778
        %vm824 = vcmp.eq.s32.totalorder %v164, %v778
        %vm825 = vcmp.eq.s32.totalorder %v163, %v781
        %vm826 = vcmp.eq.s32.totalorder %v164, %v781
        %vm827 = vcmp.eq.s32.totalorder %v163, %v784
        %vm828 = vcmp.eq.s32.totalorder %v164, %v784
        %vm829 = vcmp.eq.s32.totalorder %v163, %v787
        %vm830 = vcmp.eq.s32.totalorder %v164, %v787
        %vm831 = vcmp.eq.s32.totalorder %v163, %v790
        %vm832 = vcmp.eq.s32.totalorder %v164, %v790
        %vm833 = vcmp.eq.s32.totalorder %v163, %v793
        %vm834 = vcmp.eq.s32.totalorder %v164, %v793
        %vm835 = vcmp.eq.s32.totalorder %v163, %v796
        %vm836 = vcmp.eq.s32.totalorder %v164, %v796
        %vm837 = vcmp.eq.s32.totalorder %v163, %v799
        %vm838 = vcmp.eq.s32.totalorder %v164, %v799
        %vm839 = vcmp.eq.s32.totalorder %v163, %v802
        %vm840 = vcmp.eq.s32.totalorder %v164, %v802
        %vm841 = vcmp.eq.s32.totalorder %v163, %v805
        %vm842 = vcmp.eq.s32.totalorder %v164, %v805
        %vm843 = vcmp.eq.s32.totalorder %v163, %v808
        %vm844 = vcmp.eq.s32.totalorder %v164, %v808
        %vm845 = vcmp.eq.s32.totalorder %v163, %v811
        %vm846 = vcmp.eq.s32.totalorder %v164, %v811
        %vm847 = vcmp.eq.s32.totalorder %v163, %v814
        %vm848 = vcmp.eq.s32.totalorder %v164, %v814
        %vm849 = vcmp.eq.s32.totalorder %v163, %v817
        %vm850 = vcmp.eq.s32.totalorder %v164, %v817
        %vm851 = vcmp.eq.s32.totalorder %v163, %v820
        %vm852 = vcmp.eq.s32.totalorder %v164, %v820
        %vm853 = vmor %vm725, %vm821
        %vm854 = vmor %vm726, %vm822
        %vm855 = vmor %vm727, %vm823
        %vm856 = vmor %vm728, %vm824
        %vm857 = vmor %vm729, %vm825
        %vm858 = vmor %vm730, %vm826
        %vm859 = vmor %vm731, %vm827
        %vm860 = vmor %vm732, %vm828
        %vm861 = vmor %vm733, %vm829
        %vm862 = vmor %vm734, %vm830
        %vm863 = vmor %vm735, %vm831
        %vm864 = vmor %vm736, %vm832
        %vm865 = vmor %vm737, %vm833
        %vm866 = vmor %vm738, %vm834
        %vm867 = vmor %vm739, %vm835
        %vm868 = vmor %vm740, %vm836
        %vm869 = vmor %vm741, %vm837
        %vm870 = vmor %vm742, %vm838
        %vm871 = vmor %vm743, %vm839
        %vm872 = vmor %vm744, %vm840
        %vm873 = vmor %vm745, %vm841
        %vm874 = vmor %vm746, %vm842
        %vm875 = vmor %vm747, %vm843
        %vm876 = vmor %vm748, %vm844
        %vm877 = vmor %vm749, %vm845
        %vm878 = vmor %vm750, %vm846
        %vm879 = vmor %vm751, %vm847
        %vm880 = vmor %vm752, %vm848
        %vm881 = vmor %vm753, %vm849
        %vm882 = vmor %vm754, %vm850
        %vm883 = vmor %vm755, %vm851
        %vm884 = vmor %vm756, %vm852
        %v885 = vadd.s32 %v146, 164
        %v886 = vadd.s32 %v147, 164
        %v887 = vadd.s32 %v148, 164
        %v888 = vadd.s32 %v149, 164
        %v889 = vadd.s32 %v150, 164
        %v890 = vadd.s32 %v151, 164
        %v891 = vadd.s32 %v152, 164
        %v892 = vadd.s32 %v153, 164
        %v893 = vadd.s32 %v154, 164
        %v894 = vadd.s32 %v155, 164
        %v895 = vadd.s32 %v156, 164
        %v896 = vadd.s32 %v157, 164
        %v897 = vadd.s32 %v158, 164
        %v898 = vadd.s32 %v159, 164
        %v899 = vadd.s32 %v160, 164
        %v900 = vadd.s32 %v161, 164
        %901 = vset.pattern.permute.xlu0 6
        %902 = vperm.xlu0 %901, %v885
        %v903 = vpop.permute.xlu0 %902
        %904 = vset.pattern.permute.xlu0 6
        %905 = vperm.xlu0 %904, %v886
        %v906 = vpop.permute.xlu0 %905
        %907 = vset.pattern.permute.xlu0 6
        %908 = vperm.xlu0 %907, %v887
        %v909 = vpop.permute.xlu0 %908
        %910 = vset.pattern.permute.xlu0 6
        %911 = vperm.xlu0 %910, %v888
        %v912 = vpop.permute.xlu0 %911
        %913 = vset.pattern.permute.xlu0 6
        %914 = vperm.xlu0 %913, %v889
        %v915 = vpop.permute.xlu0 %914
        %916 = vset.pattern.permute.xlu0 6
        %917 = vperm.xlu0 %916, %v890
        %v918 = vpop.permute.xlu0 %917
        %919 = vset.pattern.permute.xlu0 6
        %920 = vperm.xlu0 %919, %v891
        %v921 = vpop.permute.xlu0 %920
        %922 = vset.pattern.permute.xlu0 6
        %923 = vperm.xlu0 %922, %v892
        %v924 = vpop.permute.xlu0 %923
        %925 = vset.pattern.permute.xlu0 6
        %926 = vperm.xlu0 %925, %v893
        %v927 = vpop.permute.xlu0 %926
        %928 = vset.pattern.permute.xlu0 6
        %929 = vperm.xlu0 %928, %v894
        %v930 = vpop.permute.xlu0 %929
        %931 = vset.pattern.permute.xlu0 6
        %932 = vperm.xlu0 %931, %v895
        %v933 = vpop.permute.xlu0 %932
        %934 = vset.pattern.permute.xlu0 6
        %935 = vperm.xlu0 %934, %v896
        %v936 = vpop.permute.xlu0 %935
        %937 = vset.pattern.permute.xlu0 6
        %938 = vperm.xlu0 %937, %v897
        %v939 = vpop.permute.xlu0 %938
        %940 = vset.pattern.permute.xlu0 6
        %941 = vperm.xlu0 %940, %v898
        %v942 = vpop.permute.xlu0 %941
        %943 = vset.pattern.permute.xlu0 6
        %944 = vperm.xlu0 %943, %v899
        %v945 = vpop.permute.xlu0 %944
        %946 = vset.pattern.permute.xlu0 6
        %947 = vperm.xlu0 %946, %v900
        %v948 = vpop.permute.xlu0 %947
        %vm949 = vcmp.eq.s32.totalorder %v163, %v903
        %vm950 = vcmp.eq.s32.totalorder %v164, %v903
        %vm951 = vcmp.eq.s32.totalorder %v163, %v906
        %vm952 = vcmp.eq.s32.totalorder %v164, %v906
        %vm953 = vcmp.eq.s32.totalorder %v163, %v909
        %vm954 = vcmp.eq.s32.totalorder %v164, %v909
        %vm955 = vcmp.eq.s32.totalorder %v163, %v912
        %vm956 = vcmp.eq.s32.totalorder %v164, %v912
        %vm957 = vcmp.eq.s32.totalorder %v163, %v915
        %vm958 = vcmp.eq.s32.totalorder %v164, %v915
        %vm959 = vcmp.eq.s32.totalorder %v163, %v918
        %vm960 = vcmp.eq.s32.totalorder %v164, %v918
        %vm961 = vcmp.eq.s32.totalorder %v163, %v921
        %vm962 = vcmp.eq.s32.totalorder %v164, %v921
        %vm963 = vcmp.eq.s32.totalorder %v163, %v924
        %vm964 = vcmp.eq.s32.totalorder %v164, %v924
        %vm965 = vcmp.eq.s32.totalorder %v163, %v927
        %vm966 = vcmp.eq.s32.totalorder %v164, %v927
        %vm967 = vcmp.eq.s32.totalorder %v163, %v930
        %vm968 = vcmp.eq.s32.totalorder %v164, %v930
        %vm969 = vcmp.eq.s32.totalorder %v163, %v933
        %vm970 = vcmp.eq.s32.totalorder %v164, %v933
        %vm971 = vcmp.eq.s32.totalorder %v163, %v936
        %vm972 = vcmp.eq.s32.totalorder %v164, %v936
        %vm973 = vcmp.eq.s32.totalorder %v163, %v939
        %vm974 = vcmp.eq.s32.totalorder %v164, %v939
        %vm975 = vcmp.eq.s32.totalorder %v163, %v942
        %vm976 = vcmp.eq.s32.totalorder %v164, %v942
        %vm977 = vcmp.eq.s32.totalorder %v163, %v945
        %vm978 = vcmp.eq.s32.totalorder %v164, %v945
        %vm979 = vcmp.eq.s32.totalorder %v163, %v948
        %vm980 = vcmp.eq.s32.totalorder %v164, %v948
        %vm981 = vmor %vm853, %vm949
        %vm982 = vmor %vm854, %vm950
        %vm983 = vmor %vm855, %vm951
        %vm984 = vmor %vm856, %vm952
        %vm985 = vmor %vm857, %vm953
        %vm986 = vmor %vm858, %vm954
        %vm987 = vmor %vm859, %vm955
        %vm988 = vmor %vm860, %vm956
        %vm989 = vmor %vm861, %vm957
        %vm990 = vmor %vm862, %vm958
        %vm991 = vmor %vm863, %vm959
        %vm992 = vmor %vm864, %vm960
        %vm993 = vmor %vm865, %vm961
        %vm994 = vmor %vm866, %vm962
        %vm995 = vmor %vm867, %vm963
        %vm996 = vmor %vm868, %vm964
        %vm997 = vmor %vm869, %vm965
        %vm998 = vmor %vm870, %vm966
        %vm999 = vmor %vm871, %vm967
        %vm1000 = vmor %vm872, %vm968
        %vm1001 = vmor %vm873, %vm969
        %vm1002 = vmor %vm874, %vm970
        %vm1003 = vmor %vm875, %vm971
        %vm1004 = vmor %vm876, %vm972
        %vm1005 = vmor %vm877, %vm973
        %vm1006 = vmor %vm878, %vm974
        %vm1007 = vmor %vm879, %vm975
        %vm1008 = vmor %vm880, %vm976
        %vm1009 = vmor %vm881, %vm977
        %vm1010 = vmor %vm882, %vm978
        %vm1011 = vmor %vm883, %vm979
        %vm1012 = vmor %vm884, %vm980
        %v1013 = vadd.s32 %v146, 170
        %v1014 = vadd.s32 %v147, 170
        %v1015 = vadd.s32 %v148, 170
        %v1016 = vadd.s32 %v149, 170
        %v1017 = vadd.s32 %v150, 170
        %v1018 = vadd.s32 %v151, 170
        %v1019 = vadd.s32 %v152, 170
        %v1020 = vadd.s32 %v153, 170
        %v1021 = vadd.s32 %v154, 170
        %v1022 = vadd.s32 %v155, 170
        %v1023 = vadd.s32 %v156, 170
        %v1024 = vadd.s32 %v157, 170
        %v1025 = vadd.s32 %v158, 170
        %v1026 = vadd.s32 %v159, 170
        %v1027 = vadd.s32 %v160, 170
        %v1028 = vadd.s32 %v161, 170
        %1029 = vset.pattern.permute.xlu0 7
        %1030 = vperm.xlu0 %1029, %v1013
        %v1031 = vpop.permute.xlu0 %1030
        %1032 = vset.pattern.permute.xlu0 7
        %1033 = vperm.xlu0 %1032, %v1014
        %v1034 = vpop.permute.xlu0 %1033
        %1035 = vset.pattern.permute.xlu0 7
        %1036 = vperm.xlu0 %1035, %v1015
        %v1037 = vpop.permute.xlu0 %1036
        %1038 = vset.pattern.permute.xlu0 7
        %1039 = vperm.xlu0 %1038, %v1016
        %v1040 = vpop.permute.xlu0 %1039
        %1041 = vset.pattern.permute.xlu0 7
        %1042 = vperm.xlu0 %1041, %v1017
        %v1043 = vpop.permute.xlu0 %1042
        %1044 = vset.pattern.permute.xlu0 7
        %1045 = vperm.xlu0 %1044, %v1018
        %v1046 = vpop.permute.xlu0 %1045
        %1047 = vset.pattern.permute.xlu0 7
        %1048 = vperm.xlu0 %1047, %v1019
        %v1049 = vpop.permute.xlu0 %1048
        %1050 = vset.pattern.permute.xlu0 7
        %1051 = vperm.xlu0 %1050, %v1020
        %v1052 = vpop.permute.xlu0 %1051
        %1053 = vset.pattern.permute.xlu0 7
        %1054 = vperm.xlu0 %1053, %v1021
        %v1055 = vpop.permute.xlu0 %1054
        %1056 = vset.pattern.permute.xlu0 7
        %1057 = vperm.xlu0 %1056, %v1022
        %v1058 = vpop.permute.xlu0 %1057
        %1059 = vset.pattern.permute.xlu0 7
        %1060 = vperm.xlu0 %1059, %v1023
        %v1061 = vpop.permute.xlu0 %1060
        %1062 = vset.pattern.permute.xlu0 7
        %1063 = vperm.xlu0 %1062, %v1024
        %v1064 = vpop.permute.xlu0 %1063
        %1065 = vset.pattern.permute.xlu0 7
        %1066 = vperm.xlu0 %1065, %v1025
        %v1067 = vpop.permute.xlu0 %1066
        %1068 = vset.pattern.permute.xlu0 7
        %1069 = vperm.xlu0 %1068, %v1026
        %v1070 = vpop.permute.xlu0 %1069
        %1071 = vset.pattern.permute.xlu0 7
        %1072 = vperm.xlu0 %1071, %v1027
        %v1073 = vpop.permute.xlu0 %1072
        %1074 = vset.pattern.permute.xlu0 7
        %1075 = vperm.xlu0 %1074, %v1028
        %v1076 = vpop.permute.xlu0 %1075
        %vm1077 = vcmp.eq.s32.totalorder %v163, %v1031
        %vm1078 = vcmp.eq.s32.totalorder %v164, %v1031
        %vm1079 = vcmp.eq.s32.totalorder %v163, %v1034
        %vm1080 = vcmp.eq.s32.totalorder %v164, %v1034
        %vm1081 = vcmp.eq.s32.totalorder %v163, %v1037
        %vm1082 = vcmp.eq.s32.totalorder %v164, %v1037
        %vm1083 = vcmp.eq.s32.totalorder %v163, %v1040
        %vm1084 = vcmp.eq.s32.totalorder %v164, %v1040
        %vm1085 = vcmp.eq.s32.totalorder %v163, %v1043
        %vm1086 = vcmp.eq.s32.totalorder %v164, %v1043
        %vm1087 = vcmp.eq.s32.totalorder %v163, %v1046
        %vm1088 = vcmp.eq.s32.totalorder %v164, %v1046
        %vm1089 = vcmp.eq.s32.totalorder %v163, %v1049
        %vm1090 = vcmp.eq.s32.totalorder %v164, %v1049
        %vm1091 = vcmp.eq.s32.totalorder %v163, %v1052
        %vm1092 = vcmp.eq.s32.totalorder %v164, %v1052
        %vm1093 = vcmp.eq.s32.totalorder %v163, %v1055
        %vm1094 = vcmp.eq.s32.totalorder %v164, %v1055
        %vm1095 = vcmp.eq.s32.totalorder %v163, %v1058
        %vm1096 = vcmp.eq.s32.totalorder %v164, %v1058
        %vm1097 = vcmp.eq.s32.totalorder %v163, %v1061
        %vm1098 = vcmp.eq.s32.totalorder %v164, %v1061
        %vm1099 = vcmp.eq.s32.totalorder %v163, %v1064
        %vm1100 = vcmp.eq.s32.totalorder %v164, %v1064
        %vm1101 = vcmp.eq.s32.totalorder %v163, %v1067
        %vm1102 = vcmp.eq.s32.totalorder %v164, %v1067
        %vm1103 = vcmp.eq.s32.totalorder %v163, %v1070
        %vm1104 = vcmp.eq.s32.totalorder %v164, %v1070
        %vm1105 = vcmp.eq.s32.totalorder %v163, %v1073
        %vm1106 = vcmp.eq.s32.totalorder %v164, %v1073
        %vm1107 = vcmp.eq.s32.totalorder %v163, %v1076
        %vm1108 = vcmp.eq.s32.totalorder %v164, %v1076
        %vm1109 = vmor %vm981, %vm1077
        %vm1110 = vmor %vm982, %vm1078
        %vm1111 = vmor %vm983, %vm1079
        %vm1112 = vmor %vm984, %vm1080
        %vm1113 = vmor %vm985, %vm1081
        %vm1114 = vmor %vm986, %vm1082
        %vm1115 = vmor %vm987, %vm1083
        %vm1116 = vmor %vm988, %vm1084
        %vm1117 = vmor %vm989, %vm1085
        %vm1118 = vmor %vm990, %vm1086
        %vm1119 = vmor %vm991, %vm1087
        %vm1120 = vmor %vm992, %vm1088
        %vm1121 = vmor %vm993, %vm1089
        %vm1122 = vmor %vm994, %vm1090
        %vm1123 = vmor %vm995, %vm1091
        %vm1124 = vmor %vm996, %vm1092
        %vm1125 = vmor %vm997, %vm1093
        %vm1126 = vmor %vm998, %vm1094
        %vm1127 = vmor %vm999, %vm1095
        %vm1128 = vmor %vm1000, %vm1096
        %vm1129 = vmor %vm1001, %vm1097
        %vm1130 = vmor %vm1002, %vm1098
        %vm1131 = vmor %vm1003, %vm1099
        %vm1132 = vmor %vm1004, %vm1100
        %vm1133 = vmor %vm1005, %vm1101
        %vm1134 = vmor %vm1006, %vm1102
        %vm1135 = vmor %vm1007, %vm1103
        %vm1136 = vmor %vm1008, %vm1104
        %vm1137 = vmor %vm1009, %vm1105
        %vm1138 = vmor %vm1010, %vm1106
        %vm1139 = vmor %vm1011, %vm1107
        %vm1140 = vmor %vm1012, %vm1108
        %v1141 = vadd.s32 %v146, 172
        %v1142 = vadd.s32 %v147, 172
        %v1143 = vadd.s32 %v148, 172
        %v1144 = vadd.s32 %v149, 172
        %v1145 = vadd.s32 %v150, 172
        %v1146 = vadd.s32 %v151, 172
        %v1147 = vadd.s32 %v152, 172
        %v1148 = vadd.s32 %v153, 172
        %v1149 = vadd.s32 %v154, 172
        %v1150 = vadd.s32 %v155, 172
        %v1151 = vadd.s32 %v156, 172
        %v1152 = vadd.s32 %v157, 172
        %v1153 = vadd.s32 %v158, 172
        %v1154 = vadd.s32 %v159, 172
        %v1155 = vadd.s32 %v160, 172
        %v1156 = vadd.s32 %v161, 172
        %1157 = vset.pattern.permute.xlu0 8
        %1158 = vperm.xlu0 %1157, %v1141
        %v1159 = vpop.permute.xlu0 %1158
        %1160 = vset.pattern.permute.xlu0 8
        %1161 = vperm.xlu0 %1160, %v1142
        %v1162 = vpop.permute.xlu0 %1161
        %1163 = vset.pattern.permute.xlu0 8
        %1164 = vperm.xlu0 %1163, %v1143
        %v1165 = vpop.permute.xlu0 %1164
        %1166 = vset.pattern.permute.xlu0 8
        %1167 = vperm.xlu0 %1166, %v1144
        %v1168 = vpop.permute.xlu0 %1167
        %1169 = vset.pattern.permute.xlu0 8
        %1170 = vperm.xlu0 %1169, %v1145
        %v1171 = vpop.permute.xlu0 %1170
        %1172 = vset.pattern.permute.xlu0 8
        %1173 = vperm.xlu0 %1172, %v1146
        %v1174 = vpop.permute.xlu0 %1173
        %1175 = vset.pattern.permute.xlu0 8
        %1176 = vperm.xlu0 %1175, %v1147
        %v1177 = vpop.permute.xlu0 %1176
        %1178 = vset.pattern.permute.xlu0 8
        %1179 = vperm.xlu0 %1178, %v1148
        %v1180 = vpop.permute.xlu0 %1179
        %1181 = vset.pattern.permute.xlu0 8
        %1182 = vperm.xlu0 %1181, %v1149
        %v1183 = vpop.permute.xlu0 %1182
        %1184 = vset.pattern.permute.xlu0 8
        %1185 = vperm.xlu0 %1184, %v1150
        %v1186 = vpop.permute.xlu0 %1185
        %1187 = vset.pattern.permute.xlu0 8
        %1188 = vperm.xlu0 %1187, %v1151
        %v1189 = vpop.permute.xlu0 %1188
        %1190 = vset.pattern.permute.xlu0 8
        %1191 = vperm.xlu0 %1190, %v1152
        %v1192 = vpop.permute.xlu0 %1191
        %1193 = vset.pattern.permute.xlu0 8
        %1194 = vperm.xlu0 %1193, %v1153
        %v1195 = vpop.permute.xlu0 %1194
        %1196 = vset.pattern.permute.xlu0 8
        %1197 = vperm.xlu0 %1196, %v1154
        %v1198 = vpop.permute.xlu0 %1197
        %1199 = vset.pattern.permute.xlu0 8
        %1200 = vperm.xlu0 %1199, %v1155
        %v1201 = vpop.permute.xlu0 %1200
        %1202 = vset.pattern.permute.xlu0 8
        %1203 = vperm.xlu0 %1202, %v1156
        %v1204 = vpop.permute.xlu0 %1203
        %vm1205 = vcmp.eq.s32.totalorder %v163, %v1159
        %vm1206 = vcmp.eq.s32.totalorder %v164, %v1159
        %vm1207 = vcmp.eq.s32.totalorder %v163, %v1162
        %vm1208 = vcmp.eq.s32.totalorder %v164, %v1162
        %vm1209 = vcmp.eq.s32.totalorder %v163, %v1165
        %vm1210 = vcmp.eq.s32.totalorder %v164, %v1165
        %vm1211 = vcmp.eq.s32.totalorder %v163, %v1168
        %vm1212 = vcmp.eq.s32.totalorder %v164, %v1168
        %vm1213 = vcmp.eq.s32.totalorder %v163, %v1171
        %vm1214 = vcmp.eq.s32.totalorder %v164, %v1171
        %vm1215 = vcmp.eq.s32.totalorder %v163, %v1174
        %vm1216 = vcmp.eq.s32.totalorder %v164, %v1174
        %vm1217 = vcmp.eq.s32.totalorder %v163, %v1177
        %vm1218 = vcmp.eq.s32.totalorder %v164, %v1177
        %vm1219 = vcmp.eq.s32.totalorder %v163, %v1180
        %vm1220 = vcmp.eq.s32.totalorder %v164, %v1180
        %vm1221 = vcmp.eq.s32.totalorder %v163, %v1183
        %vm1222 = vcmp.eq.s32.totalorder %v164, %v1183
        %vm1223 = vcmp.eq.s32.totalorder %v163, %v1186
        %vm1224 = vcmp.eq.s32.totalorder %v164, %v1186
        %vm1225 = vcmp.eq.s32.totalorder %v163, %v1189
        %vm1226 = vcmp.eq.s32.totalorder %v164, %v1189
        %vm1227 = vcmp.eq.s32.totalorder %v163, %v1192
        %vm1228 = vcmp.eq.s32.totalorder %v164, %v1192
        %vm1229 = vcmp.eq.s32.totalorder %v163, %v1195
        %vm1230 = vcmp.eq.s32.totalorder %v164, %v1195
        %vm1231 = vcmp.eq.s32.totalorder %v163, %v1198
        %vm1232 = vcmp.eq.s32.totalorder %v164, %v1198
        %vm1233 = vcmp.eq.s32.totalorder %v163, %v1201
        %vm1234 = vcmp.eq.s32.totalorder %v164, %v1201
        %vm1235 = vcmp.eq.s32.totalorder %v163, %v1204
        %vm1236 = vcmp.eq.s32.totalorder %v164, %v1204
        %vm1237 = vmor %vm1109, %vm1205
        %vm1238 = vmor %vm1110, %vm1206
        %vm1239 = vmor %vm1111, %vm1207
        %vm1240 = vmor %vm1112, %vm1208
        %vm1241 = vmor %vm1113, %vm1209
        %vm1242 = vmor %vm1114, %vm1210
        %vm1243 = vmor %vm1115, %vm1211
        %vm1244 = vmor %vm1116, %vm1212
        %vm1245 = vmor %vm1117, %vm1213
        %vm1246 = vmor %vm1118, %vm1214
        %vm1247 = vmor %vm1119, %vm1215
        %vm1248 = vmor %vm1120, %vm1216
        %vm1249 = vmor %vm1121, %vm1217
        %vm1250 = vmor %vm1122, %vm1218
        %vm1251 = vmor %vm1123, %vm1219
        %vm1252 = vmor %vm1124, %vm1220
        %vm1253 = vmor %vm1125, %vm1221
        %vm1254 = vmor %vm1126, %vm1222
        %vm1255 = vmor %vm1127, %vm1223
        %vm1256 = vmor %vm1128, %vm1224
        %vm1257 = vmor %vm1129, %vm1225
        %vm1258 = vmor %vm1130, %vm1226
        %vm1259 = vmor %vm1131, %vm1227
        %vm1260 = vmor %vm1132, %vm1228
        %vm1261 = vmor %vm1133, %vm1229
        %vm1262 = vmor %vm1134, %vm1230
        %vm1263 = vmor %vm1135, %vm1231
        %vm1264 = vmor %vm1136, %vm1232
        %vm1265 = vmor %vm1137, %vm1233
        %vm1266 = vmor %vm1138, %vm1234
        %vm1267 = vmor %vm1139, %vm1235
        %vm1268 = vmor %vm1140, %vm1236
        %v1269 = vsel %vm1237, 1, 0
        %v1270 = vsel %vm1238, 1, 0
        %v1271 = vsel %vm1239, 1, 0
        %v1272 = vsel %vm1240, 1, 0
        %v1273 = vsel %vm1241, 1, 0
        %v1274 = vsel %vm1242, 1, 0
        %v1275 = vsel %vm1243, 1, 0
        %v1276 = vsel %vm1244, 1, 0
        %v1277 = vsel %vm1245, 1, 0
        %v1278 = vsel %vm1246, 1, 0
        %v1279 = vsel %vm1247, 1, 0
        %v1280 = vsel %vm1248, 1, 0
        %v1281 = vsel %vm1249, 1, 0
        %v1282 = vsel %vm1250, 1, 0
        %v1283 = vsel %vm1251, 1, 0
        %v1284 = vsel %vm1252, 1, 0
        %v1285 = vsel %vm1253, 1, 0
        %v1286 = vsel %vm1254, 1, 0
        %v1287 = vsel %vm1255, 1, 0
        %v1288 = vsel %vm1256, 1, 0
        %v1289 = vsel %vm1257, 1, 0
        %v1290 = vsel %vm1258, 1, 0
        %v1291 = vsel %vm1259, 1, 0
        %v1292 = vsel %vm1260, 1, 0
        %v1293 = vsel %vm1261, 1, 0
        %v1294 = vsel %vm1262, 1, 0
        %v1295 = vsel %vm1263, 1, 0
        %v1296 = vsel %vm1264, 1, 0
        %v1297 = vsel %vm1265, 1, 0
        %v1298 = vsel %vm1266, 1, 0
        %v1299 = vsel %vm1267, 1, 0
        %v1300 = vsel %vm1268, 1, 0
        %v1301 = vcvt.s32.f32 %v1269
        %v1302 = vcvt.s32.f32 %v1270
        %v1303 = vcvt.s32.f32 %v1271
        %v1304 = vcvt.s32.f32 %v1272
        %v1305 = vcvt.s32.f32 %v1273
        %v1306 = vcvt.s32.f32 %v1274
        %v1307 = vcvt.s32.f32 %v1275
        %v1308 = vcvt.s32.f32 %v1276
        %v1309 = vcvt.s32.f32 %v1277
        %v1310 = vcvt.s32.f32 %v1278
        %v1311 = vcvt.s32.f32 %v1279
        %v1312 = vcvt.s32.f32 %v1280
        %v1313 = vcvt.s32.f32 %v1281
        %v1314 = vcvt.s32.f32 %v1282
        %v1315 = vcvt.s32.f32 %v1283
        %v1316 = vcvt.s32.f32 %v1284
        %v1317 = vcvt.s32.f32 %v1285
        %v1318 = vcvt.s32.f32 %v1286
        %v1319 = vcvt.s32.f32 %v1287
        %v1320 = vcvt.s32.f32 %v1288
        %v1321 = vcvt.s32.f32 %v1289
        %v1322 = vcvt.s32.f32 %v1290
        %v1323 = vcvt.s32.f32 %v1291
        %v1324 = vcvt.s32.f32 %v1292
        %v1325 = vcvt.s32.f32 %v1293
        %v1326 = vcvt.s32.f32 %v1294
        %v1327 = vcvt.s32.f32 %v1295
        %v1328 = vcvt.s32.f32 %v1296
        %v1329 = vcvt.s32.f32 %v1297
        %v1330 = vcvt.s32.f32 %v1298
        %v1331 = vcvt.s32.f32 %v1299
        %v1332 = vcvt.s32.f32 %v1300
        %v1333 = vpack.c.bf16 %v1303, %v1301
        %v1334 = vpack.c.bf16 %v1304, %v1302
        %v1335 = vpack.c.bf16 %v1307, %v1305
        %v1336 = vpack.c.bf16 %v1308, %v1306
        %v1337 = vpack.c.bf16 %v1311, %v1309
        %v1338 = vpack.c.bf16 %v1312, %v1310
        %v1339 = vpack.c.bf16 %v1315, %v1313
        %v1340 = vpack.c.bf16 %v1316, %v1314
        %v1341 = vpack.c.bf16 %v1319, %v1317
        %v1342 = vpack.c.bf16 %v1320, %v1318
        %v1343 = vpack.c.bf16 %v1323, %v1321
        %v1344 = vpack.c.bf16 %v1324, %v1322
        %v1345 = vpack.c.bf16 %v1327, %v1325
        %v1346 = vpack.c.bf16 %v1328, %v1326
        %v1347 = vpack.c.bf16 %v1331, %v1329
        %v1348 = vpack.c.bf16 %v1332, %v1330
        %v1349 = vld [vmem:[%s1] sm:$0xf]
        %v1350 = vld [vmem:[%s1 + $0x4] sm:$0xf]
        %v1351 = vld [vmem:[%s1 + $0x8] sm:$0xf]
        %v1352 = vld [vmem:[%s1 + $0xc] sm:$0xf]
        %v1353 = vld [vmem:[%s1 + $0x10] sm:$0xf]
        %v1354 = vld [vmem:[%s1 + $0x14] sm:$0xf]
        %v1355 = vld [vmem:[%s1 + $0x18] sm:$0xf]
        %v1356 = vld [vmem:[%s1 + $0x1c] sm:$0xf]
        %v1357 = vld [vmem:[%s1 + $0x20] sm:$0xf]
        %v1358 = vld [vmem:[%s1 + $0x24] sm:$0xf]
        %v1359 = vld [vmem:[%s1 + $0x28] sm:$0xf]
        %v1360 = vld [vmem:[%s1 + $0x2c] sm:$0xf]
        %v1361 = vld [vmem:[%s1 + $0x30] sm:$0xf]
        %v1362 = vld [vmem:[%s1 + $0x34] sm:$0xf]
        %v1363 = vld [vmem:[%s1 + $0x38] sm:$0xf]
        %v1364 = vld [vmem:[%s1 + $0x3c] sm:$0xf]
        %v1365 = vld [vmem:[%s1 + $0x40] sm:$0xf]
        %v1366 = vld [vmem:[%s1 + $0x44] sm:$0xf]
        %v1367 = vld [vmem:[%s1 + $0x48] sm:$0xf]
        %v1368 = vld [vmem:[%s1 + $0x4c] sm:$0xf]
        %v1369 = vld [vmem:[%s1 + $0x50] sm:$0xf]
        %v1370 = vld [vmem:[%s1 + $0x54] sm:$0xf]
        %v1371 = vld [vmem:[%s1 + $0x58] sm:$0xf]
        %v1372 = vld [vmem:[%s1 + $0x5c] sm:$0xf]
        %v1373 = vld [vmem:[%s1 + $0x60] sm:$0xf]
        %v1374 = vld [vmem:[%s1 + $0x64] sm:$0xf]
        %v1375 = vld [vmem:[%s1 + $0x68] sm:$0xf]
        %v1376 = vld [vmem:[%s1 + $0x6c] sm:$0xf]
        %v1377 = vld [vmem:[%s1 + $0x70] sm:$0xf]
        %v1378 = vld [vmem:[%s1 + $0x74] sm:$0xf]
        %v1379 = vld [vmem:[%s1 + $0x78] sm:$0xf]
        %v1380 = vld [vmem:[%s1 + $0x7c] sm:$0xf]
        %v1413 = vunpack.c.l.b16 %v1349
        %v1414 = vunpack.c.l.b16 %v1350
        %v1415 = vunpack.c.l.b16 %v1351
        %v1416 = vunpack.c.l.b16 %v1352
        %v1417 = vunpack.c.l.b16 %v1353
        %v1418 = vunpack.c.l.b16 %v1354
        %v1419 = vunpack.c.l.b16 %v1355
        %v1420 = vunpack.c.l.b16 %v1356
        %v1421 = vunpack.c.l.b16 %v1357
        %v1422 = vunpack.c.l.b16 %v1358
        %v1423 = vunpack.c.l.b16 %v1359
        %v1424 = vunpack.c.l.b16 %v1360
        %v1425 = vunpack.c.l.b16 %v1361
        %v1426 = vunpack.c.l.b16 %v1362
        %v1427 = vunpack.c.l.b16 %v1363
        %v1428 = vunpack.c.l.b16 %v1364
        %v1429 = vunpack.c.l.b16 %v1365
        %v1430 = vunpack.c.l.b16 %v1366
        %v1431 = vunpack.c.l.b16 %v1367
        %v1432 = vunpack.c.l.b16 %v1368
        %v1433 = vunpack.c.l.b16 %v1369
        %v1434 = vunpack.c.l.b16 %v1370
        %v1435 = vunpack.c.l.b16 %v1371
        %v1436 = vunpack.c.l.b16 %v1372
        %v1437 = vunpack.c.l.b16 %v1373
        %v1438 = vunpack.c.l.b16 %v1374
        %v1439 = vunpack.c.l.b16 %v1375
        %v1440 = vunpack.c.l.b16 %v1376
        %v1441 = vunpack.c.l.b16 %v1377
        %v1442 = vunpack.c.l.b16 %v1378
        %v1443 = vunpack.c.l.b16 %v1379
        %v1444 = vunpack.c.l.b16 %v1380
        %v1445 = vpack.c.b16 %v1414, %v1413
        %v1446 = vpack.c.b16 %v1416, %v1415
        %v1447 = vpack.c.b16 %v1418, %v1417
        %v1448 = vpack.c.b16 %v1420, %v1419
        %v1449 = vpack.c.b16 %v1422, %v1421
        %v1450 = vpack.c.b16 %v1424, %v1423
        %v1451 = vpack.c.b16 %v1426, %v1425
        %v1452 = vpack.c.b16 %v1428, %v1427
        %v1453 = vpack.c.b16 %v1430, %v1429
        %v1454 = vpack.c.b16 %v1432, %v1431
        %v1455 = vpack.c.b16 %v1434, %v1433
        %v1456 = vpack.c.b16 %v1436, %v1435
        %v1457 = vpack.c.b16 %v1438, %v1437
        %v1458 = vpack.c.b16 %v1440, %v1439
        %v1459 = vpack.c.b16 %v1442, %v1441
        %v1460 = vpack.c.b16 %v1444, %v1443
        %1477 = vmatprep.subr.bf16.mxu0 0
        %1478 = vmatpush1.bf16.msra.mxu0 %v1445
        %1479 = vmatprep.subr.bf16.mxu0 0
        %1480 = vmatpush1.bf16.msra.mxu0 %v1446
        %1481 = vmatprep.subr.bf16.mxu0 0
        %1482 = vmatpush1.bf16.msra.mxu0 %v1447
        %1483 = vmatprep.subr.bf16.mxu0 0
        %1484 = vmatpush1.bf16.msra.mxu0 %v1448
        %1485 = vmatprep.subr.bf16.mxu0 0
        %1486 = vmatpush1.bf16.msra.mxu0 %v1449
        %1487 = vmatprep.subr.bf16.mxu0 0
        %1488 = vmatpush1.bf16.msra.mxu0 %v1450
        %1489 = vmatprep.subr.bf16.mxu0 0
        %1490 = vmatpush1.bf16.msra.mxu0 %v1451
        %1491 = vmatprep.subr.bf16.mxu0 0
        %1492 = vmatpush1.bf16.msra.mxu0 %v1452
        %1493 = vmatprep.subr.bf16.mxu0 0
        %1494 = vmatpush1.bf16.msra.mxu0 %v1453
        %1495 = vmatprep.subr.bf16.mxu0 0
        %1496 = vmatpush1.bf16.msra.mxu0 %v1454
        %1497 = vmatprep.subr.bf16.mxu0 0
        %1498 = vmatpush1.bf16.msra.mxu0 %v1455
        %1499 = vmatprep.subr.bf16.mxu0 0
        %1500 = vmatpush1.bf16.msra.mxu0 %v1456
        %1501 = vmatprep.subr.bf16.mxu0 0
        %1502 = vmatpush1.bf16.msra.mxu0 %v1457
        %1503 = vmatprep.subr.bf16.mxu0 0
        %1504 = vmatpush1.bf16.msra.mxu0 %v1458
        %1505 = vmatprep.subr.bf16.mxu0 0
        %1506 = vmatpush1.bf16.msra.mxu0 %v1459
        %1507 = vmatprep.subr.bf16.mxu0 0
        %1508 = vmatpush1.bf16.msra.mxu0 %v1460
        %1509 = vmatprep.mubr.bf16.mxu0 %v1334
        %1510 = vmatmul.mubr.bf16.gmra.mrb[0].mxu0 %v1333
        %v1511 = vpop.f32.mrb[0].mxu0
        %v1512 = vadd.f32 0.0, %v1511
        %v1513 = vpop.f32.mrb[0].mxu0
        %v1514 = vpop.f32.mrb[0].mxu0
        %v1515 = vadd.f32 0.0, %v1514
        %v1516 = vpop.f32.mrb[0].mxu0
        %1517 = vmatprep.mubr.bf16.mxu0 %v1336
        %1518 = vmatmul.mubr.bf16.gmra.mrb[0].mxu0 %v1335
        %v1519 = vpop.f32.mrb[0].mxu0
        %v1520 = vadd.f32 0.0, %v1519
        %v1521 = vpop.f32.mrb[0].mxu0
        %v1522 = vpop.f32.mrb[0].mxu0
        %v1523 = vadd.f32 0.0, %v1522
        %v1524 = vpop.f32.mrb[0].mxu0
        %1525 = vmatprep.mubr.bf16.mxu0 %v1338
        %1526 = vmatmul.mubr.bf16.gmra.mrb[0].mxu0 %v1337
        %v1527 = vpop.f32.mrb[0].mxu0
        %v1528 = vadd.f32 0.0, %v1527
        %v1529 = vpop.f32.mrb[0].mxu0
        %v1530 = vpop.f32.mrb[0].mxu0
        %v1531 = vadd.f32 0.0, %v1530
        %v1532 = vpop.f32.mrb[0].mxu0
        %1533 = vmatprep.mubr.bf16.mxu0 %v1340
        %1534 = vmatmul.mubr.bf16.gmra.mrb[0].mxu0 %v1339
        %v1535 = vpop.f32.mrb[0].mxu0
        %v1536 = vadd.f32 0.0, %v1535
        %v1537 = vpop.f32.mrb[0].mxu0
        %v1538 = vpop.f32.mrb[0].mxu0
        %v1539 = vadd.f32 0.0, %v1538
        %v1540 = vpop.f32.mrb[0].mxu0
        %1541 = vmatprep.mubr.bf16.mxu0 %v1342
        %1542 = vmatmul.mubr.bf16.gmra.mrb[0].mxu0 %v1341
        %v1543 = vpop.f32.mrb[0].mxu0
        %v1544 = vadd.f32 0.0, %v1543
        %v1545 = vpop.f32.mrb[0].mxu0
        %v1546 = vpop.f32.mrb[0].mxu0
        %v1547 = vadd.f32 0.0, %v1546
        %v1548 = vpop.f32.mrb[0].mxu0
        %1549 = vmatprep.mubr.bf16.mxu0 %v1344
        %1550 = vmatmul.mubr.bf16.gmra.mrb[0].mxu0 %v1343
        %v1551 = vpop.f32.mrb[0].mxu0
        %v1552 = vadd.f32 0.0, %v1551
        %v1553 = vpop.f32.mrb[0].mxu0
        %v1554 = vpop.f32.mrb[0].mxu0
        %v1555 = vadd.f32 0.0, %v1554
        %v1556 = vpop.f32.mrb[0].mxu0
        %1557 = vmatprep.mubr.bf16.mxu0 %v1346
        %1558 = vmatmul.mubr.bf16.gmra.mrb[0].mxu0 %v1345
        %v1559 = vpop.f32.mrb[0].mxu0
        %v1560 = vadd.f32 0.0, %v1559
        %v1561 = vpop.f32.mrb[0].mxu0
        %v1562 = vpop.f32.mrb[0].mxu0
        %v1563 = vadd.f32 0.0, %v1562
        %v1564 = vpop.f32.mrb[0].mxu0
        %1565 = vmatprep.mubr.bf16.mxu0 %v1348
        %1566 = vmatmul.mubr.bf16.gmra.mrb[0].mxu0 %v1347
        %v1567 = vpop.f32.mrb[0].mxu0
        %v1568 = vadd.f32 0.0, %v1567
        %v1569 = vpop.f32.mrb[0].mxu0
        %v1570 = vpop.f32.mrb[0].mxu0
        %v1571 = vadd.f32 0.0, %v1570
        %v1572 = vpop.f32.mrb[0].mxu0
        %1573 = vdwg.mxu0
        %1574 = vst [vmem:[%s137] sm:$0xff] %v1512
        %1575 = vst [vmem:[%s137 + $0x8] sm:$0xff] %v1515
        %1576 = vst [vmem:[%s137 + $0x10] sm:$0xff] %v1520
        %1577 = vst [vmem:[%s137 + $0x18] sm:$0xff] %v1523
        %1578 = vst [vmem:[%s137 + $0x20] sm:$0xff] %v1528
        %1579 = vst [vmem:[%s137 + $0x28] sm:$0xff] %v1531
        %1580 = vst [vmem:[%s137 + $0x30] sm:$0xff] %v1536
        %1581 = vst [vmem:[%s137 + $0x38] sm:$0xff] %v1539
        %1582 = vst [vmem:[%s137 + $0x40] sm:$0xff] %v1544
        %1583 = vst [vmem:[%s137 + $0x48] sm:$0xff] %v1547
        %1584 = vst [vmem:[%s137 + $0x50] sm:$0xff] %v1552
        %1585 = vst [vmem:[%s137 + $0x58] sm:$0xff] %v1555
        %1586 = vst [vmem:[%s137 + $0x60] sm:$0xff] %v1560
        %1587 = vst [vmem:[%s137 + $0x68] sm:$0xff] %v1563
        %1588 = vst [vmem:[%s137 + $0x70] sm:$0xff] %v1568
        %1589 = vst [vmem:[%s137 + $0x78] sm:$0xff] %v1571
        %s1590 = sand.u32 %s71, 1
        %s1591 = scalar_lea.sflag [#allocation3], %s1590
        %s1592 = sand.u32 %s71, 1
        %s1593 = smul.addr %s1592, 128
        %s1594 = scalar_lea.vmem [#allocation2], %s1593
        // Predicated region
        $region29: #{tpu_custom_call.1} parent=27 // pred_check
          %p1595 = pneg %p81
        $region30: #{tpu_custom_call.1} parent=27 // pred_check_branch
          %1597 = sbr.rel (%p1595) target = $region32
        $region31: #{tpu_custom_call.1} parent=27 // pred_region
          %s1598 = smul.u32 16, %s16
          %s1600 = ssub.s32 2048, 2048
          %1601 = vsyncadd %s1591, %s1600
          %s1602 = smul.addr %s1598, 128
          %s1603 = scalar_lea.hbm %s2, %s1602
          %s1604 = sshll.u32 %s1594, 4
          %s1605 = int_to_ptr.vmem [resolvable:$true] %s1604
          %1610 = dma.vmem_to_hbm [thread:$0]  %s1605, 2048, %s1603, %s1591, 128, 128, 8
        $region32: #{tpu_custom_call.1} parent=27 // pred_fallthru
          _
      $region28: #{tpu_custom_call.1} parent=5 // pred_fallthru
        _
      %p1611 = scmp.le.s32.totalorder 2, %s11
      // Predicated region
      $region33: #{tpu_custom_call.1} parent=5 // pred_check
        %p1612 = pneg %p1611
      $region34: #{tpu_custom_call.1} parent=5 // pred_check_branch
        %1614 = sbr.rel (%p1612) target = $region36
      $region35: #{tpu_custom_call.1} parent=5 // pred_region
        %s1615 = ssub.s32 %s11, 2
        // Predicated region
        $region37: #{tpu_custom_call.1} parent=35 // pred_check
          %p1616 = pneg %p87
        $region38: #{tpu_custom_call.1} parent=35 // pred_check_branch
          %1618 = sbr.rel (%p1616) target = $region40
        $region39: #{tpu_custom_call.1} parent=35 // pred_region
          %s1619 = sand.u32 %s72, 1
          %s1620 = scalar_lea.sflag [#allocation3], %s1619
          %s1621 = sand.u32 %s72, 1
          %s1622 = smul.addr %s1621, 128
          %s1623 = scalar_lea.vmem [#allocation2], %s1622
          %1624 = dma.done %s1620, 2048
        $region40: #{tpu_custom_call.1} parent=35 // pred_fallthru
          _
      $region36: #{tpu_custom_call.1} parent=5 // pred_fallthru
        _
    $region6: #{tpu_custom_call.1} parent=1 // loop_footer
      %s15 = sadd.s32 1, %s11
    $region7: #{tpu_custom_call.1} parent=1 // loop_footer_branch
      %10 = sbr.rel target = $region3
    $region8: #{tpu_custom_call.1} parent=1 // loop_exit
      _
    %1625 = vsyncpa [#allocation3], 1
    %s1626 = scalar_lea.sflag [#allocation3], 1
    %1627 = vsyncpa %s1626, 1

</llo_original>
